<compile_context>
chip_gen: v7x
topology: tpu7x:2x2x1
jax: 0.10.0
libtpu: 0.0.40
codegen_flags: <defaults>
</compile_context>

<pallas_src>
import jax
import jax.numpy as jnp
from jax import lax
from jax.experimental import pallas as pl
from jax.experimental.pallas import tpu as pltpu

# Shapes implied by the module: Linear(40*74, 4) + AvgPool((1,35), stride 7) force the
# conv output width to 546 -> input time length 558; conv2 kernel (22,1) forces 22 rows.
N_BATCH = 2
H_IN = 22            # EEG channels (conv "height")
T_IN = 558           # time samples (conv "width")
K1 = 13              # conv1 kernel width
C = 40               # conv channels
T_C1 = T_IN - K1 + 1                       # 546
POOL_W, POOL_S = 35, 7
T_POOL = (T_C1 - POOL_W) // POOL_S + 1     # 74
FEAT = C * T_POOL                          # 2960
N_CLASSES = 4
BN_EPS = 1e-5
K_FUSED = H_IN * K1                        # 286 (fused contraction depth)
K_PAD = 288                                # padded to a multiple of 8 sublanes


def _shallow_kernel(x_ref, wf_ref, scale_ref, shift_ref, pool_ref, wc_ref, b_ref, o_ref):
    """Fused conv1+conv2 (one MXU matmul) -> BN -> x**2 -> avgpool -> log -> classifier."""
    x = x_ref[0].astype(jnp.bfloat16)                       # (22, 558)

    # im2col: 13 lane-shifted copies of all 22 rows stacked on sublanes
    # (row index = k*22 + h), plus 2 zero rows to pad the contraction depth to 288.
    shifts = [x[:, k:k + T_C1] for k in range(K1)]          # 13 x (22, 546)
    shifts.append(jnp.zeros((K_PAD - K_FUSED, T_C1), jnp.bfloat16))
    patches = jnp.concatenate(shifts, axis=0)               # (288, 546)

    # conv1 ∘ conv2 as a single bf16 MXU matmul with f32 accumulation.
    y2 = jnp.dot(wf_ref[...], patches,
                 preferred_element_type=jnp.float32)        # (40, 546) f32

    # BatchNorm2d (inference; running stats folded into per-channel scale/shift), then x**2.
    z = y2 * scale_ref[...] + shift_ref[...]                # (40, 546)
    s = z * z

    # AvgPool2d((1,35), stride (1,7)) as a matmul with a 0/1 pooling matrix.
    pooled = jnp.dot(s.astype(jnp.bfloat16), pool_ref[...],
                     preferred_element_type=jnp.float32) * (1.0 / POOL_W)   # (40, 74)
    feat = jnp.log(pooled)                                  # (40, 74) f32

    # Fused classifier: logits[c] = sum_{ch,t} wc[c,ch,t] * feat[ch,t] + b[c].
    cols = []
    for cls in range(N_CLASSES):
        prod = wc_ref[cls] * feat                           # (40, 74)
        cols.append(jnp.sum(prod, axis=1, keepdims=True))   # (40, 1)
    red = jnp.concatenate(cols, axis=1)                     # (40, 4)
    logits = jnp.sum(red, axis=0, keepdims=True)            # (1, 4)
    o_ref[0] = logits + b_ref[...]                          # (1, 4)


def shallow_conv_net_forward(x_nchw, params):
    n = x_nchw.shape[0]
    x = x_nchw[:, 0].astype(jnp.bfloat16)                   # (N, 22, 558), C_in==1 squeezed

    w1 = params["w1"][:, 0, 0, :]                           # (40, 13)   [out_c, k]
    w2 = params["w2"][:, :, :, 0]                           # (40, 40, 22) [out, in, h]
    # Fused conv weight: Wf[o, k*22 + h] = sum_c W2[o,c,h] * W1[c,k]
    # (accumulation-order change vs. the sequential convs; verified against the reference).
    wf = jnp.einsum("och,ck->okh", w2, w1).reshape(C, K_FUSED)
    wf = jnp.pad(wf, ((0, 0), (0, K_PAD - K_FUSED))).astype(jnp.bfloat16)   # (40, 288)

    inv_std = params["gamma"] / jnp.sqrt(params["var"] + BN_EPS)
    scale = inv_std.reshape(C, 1).astype(jnp.float32)
    shift = (params["beta"] - params["mean"] * inv_std).reshape(C, 1).astype(jnp.float32)

    rows = jnp.arange(T_C1)[:, None]
    cols = jnp.arange(T_POOL)[None, :]
    pool_mat = ((rows >= POOL_S * cols) &
                (rows < POOL_S * cols + POOL_W)).astype(jnp.bfloat16)       # (546, 74)

    # view(-1, 40*74) is a row-major [ch, t] flatten -> classifier weight as (4, 40, 74).
    wcr = params["wc"].reshape(N_CLASSES, C, T_POOL).astype(jnp.float32)
    bc = params["bc"].reshape(1, N_CLASSES).astype(jnp.float32)

    out = pl.pallas_call(
        _shallow_kernel,
        out_shape=jax.ShapeDtypeStruct((n, 1, N_CLASSES), jnp.float32),
        grid=(n,),
        in_specs=[
            pl.BlockSpec((1, H_IN, T_IN), lambda b: (b, 0, 0)),
            pl.BlockSpec((C, K_PAD), lambda b: (0, 0)),
            pl.BlockSpec((C, 1), lambda b: (0, 0)),
            pl.BlockSpec((C, 1), lambda b: (0, 0)),
            pl.BlockSpec((T_C1, T_POOL), lambda b: (0, 0)),
            pl.BlockSpec((N_CLASSES, C, T_POOL), lambda b: (0, 0, 0)),
            pl.BlockSpec((1, N_CLASSES), lambda b: (0, 0)),
        ],
        out_specs=pl.BlockSpec((1, 1, N_CLASSES), lambda b: (b, 0, 0)),
        compiler_params=pltpu.CompilerParams(
            dimension_semantics=("parallel",),          # batch shards across TCs on v7x
            vmem_limit_bytes=32 * 1024 * 1024),
    )(x, wf, scale, shift, pool_mat, wcr, bc)

    # Dropout(0.25) is identity at inference.
    # TODO(synk): training-mode Dropout masking / batch-statistic BatchNorm not implemented.
    return out[:, 0, :]                                     # (N, 4)


def reference_forward(x_nchw, params):
    """Pure-JAX reference matching the PyTorch forward (inference mode)."""
    dn = ("NCHW", "OIHW", "NCHW")
    y = lax.conv_general_dilated(x_nchw, params["w1"], (1, 1), "VALID",
                                 dimension_numbers=dn, precision=lax.Precision.HIGHEST)
    y = lax.conv_general_dilated(y, params["w2"], (1, 1), "VALID",
                                 dimension_numbers=dn, precision=lax.Precision.HIGHEST)
    inv = params["gamma"] / jnp.sqrt(params["var"] + BN_EPS)
    y = ((y - params["mean"][None, :, None, None]) * inv[None, :, None, None]
         + params["beta"][None, :, None, None])
    y = y ** 2
    y = lax.reduce_window(y, 0.0, lax.add,
                          (1, 1, 1, POOL_W), (1, 1, 1, POOL_S), "VALID") / POOL_W
    y = jnp.log(y)
    y = y.reshape(y.shape[0], -1)
    return jnp.dot(y, params["wc"].T, precision=lax.Precision.HIGHEST) + params["bc"]


if __name__ == "__main__":
    key = jax.random.PRNGKey(0)
    ks = jax.random.split(key, 9)
    params = dict(
        w1=jax.random.normal(ks[0], (C, 1, 1, K1), jnp.float32) / jnp.sqrt(K1),
        w2=jax.random.normal(ks[1], (C, C, H_IN, 1), jnp.float32) / jnp.sqrt(C * H_IN),
        gamma=jax.random.uniform(ks[2], (C,), jnp.float32, 0.8, 1.2),
        beta=0.05 * jax.random.normal(ks[3], (C,), jnp.float32),
        mean=0.05 * jax.random.normal(ks[4], (C,), jnp.float32),
        var=jax.random.uniform(ks[5], (C,), jnp.float32, 0.8, 1.2),
        wc=jax.random.normal(ks[6], (N_CLASSES, FEAT), jnp.float32) / jnp.sqrt(FEAT),
        bc=0.05 * jax.random.normal(ks[7], (N_CLASSES,), jnp.float32),
    )
    x = jax.random.normal(ks[8], (N_BATCH, 1, H_IN, T_IN), jnp.float32)

    fwd = jax.jit(shallow_conv_net_forward)
    out = jax.block_until_ready(fwd(x, params))
    assert out.shape == (N_BATCH, N_CLASSES), out.shape

    ref = jax.block_until_ready(reference_forward(x, params))
    assert bool(jnp.allclose(out, ref, rtol=2e-2, atol=2e-2)), (out, ref)

    print("KERNEL_OK")
</pallas_src>

<mosaic_0001>
module attributes {stable_mosaic.version = 11 : i64} {
  func.func @_shallow_kernel(%arg0: i32, %arg1: memref<1x22x558xbf16, #tpu.memory_space<vmem>>, %arg2: memref<40x288xbf16, #tpu.memory_space<vmem>>, %arg3: memref<40x1xf32, #tpu.memory_space<vmem>>, %arg4: memref<40x1xf32, #tpu.memory_space<vmem>>, %arg5: memref<546x74xbf16, #tpu.memory_space<vmem>>, %arg6: memref<4x40x74xf32, #tpu.memory_space<vmem>>, %arg7: memref<1x4xf32, #tpu.memory_space<vmem>>, %arg8: memref<1x1x4xf32, #tpu.memory_space<vmem>>) attributes {dimension_semantics = [#tpu.dimension_semantics<parallel>], iteration_bounds = array<i64: 2>, scalar_prefetch = 0 : i64, scratch_operands = 0 : i64, tpu.core_type = #tpu.core_type<tc>, window_params = [{transform_indices = @transform_0, window_bounds = array<i64: 1, 22, 558>}, {pipeline_mode = #tpu.pipeline_mode<synchronous>, transform_indices = @transform_1, window_bounds = array<i64: 40, 288>}, {pipeline_mode = #tpu.pipeline_mode<synchronous>, transform_indices = @transform_2, window_bounds = array<i64: 40, 1>}, {pipeline_mode = #tpu.pipeline_mode<synchronous>, transform_indices = @transform_3, window_bounds = array<i64: 40, 1>}, {pipeline_mode = #tpu.pipeline_mode<synchronous>, transform_indices = @transform_4, window_bounds = array<i64: 546, 74>}, {pipeline_mode = #tpu.pipeline_mode<synchronous>, transform_indices = @transform_5, window_bounds = array<i64: 4, 40, 74>}, {pipeline_mode = #tpu.pipeline_mode<synchronous>, transform_indices = @transform_6, window_bounds = array<i64: 1, 4>}, {transform_indices = @transform_7, window_bounds = array<i64: 1, 1, 4>}]} {
    %c0 = arith.constant 0 : index
    %c0_0 = arith.constant 0 : index
    %c0_1 = arith.constant 0 : index
    %0 = vector.load %arg1[%c0, %c0_0, %c0_1] : memref<1x22x558xbf16, #tpu.memory_space<vmem>>, vector<1x22x558xbf16>
    %1 = vector.shape_cast %0 : vector<1x22x558xbf16> to vector<22x558xbf16>
    %2 = vector.extract_strided_slice %1 {offsets = [0, 0], sizes = [22, 546], strides = [1, 1]} : vector<22x558xbf16> to vector<22x546xbf16>
    %3 = vector.extract_strided_slice %1 {offsets = [0, 1], sizes = [22, 546], strides = [1, 1]} : vector<22x558xbf16> to vector<22x546xbf16>
    %4 = vector.extract_strided_slice %1 {offsets = [0, 2], sizes = [22, 546], strides = [1, 1]} : vector<22x558xbf16> to vector<22x546xbf16>
    %5 = vector.extract_strided_slice %1 {offsets = [0, 3], sizes = [22, 546], strides = [1, 1]} : vector<22x558xbf16> to vector<22x546xbf16>
    %6 = vector.extract_strided_slice %1 {offsets = [0, 4], sizes = [22, 546], strides = [1, 1]} : vector<22x558xbf16> to vector<22x546xbf16>
    %7 = vector.extract_strided_slice %1 {offsets = [0, 5], sizes = [22, 546], strides = [1, 1]} : vector<22x558xbf16> to vector<22x546xbf16>
    %8 = vector.extract_strided_slice %1 {offsets = [0, 6], sizes = [22, 546], strides = [1, 1]} : vector<22x558xbf16> to vector<22x546xbf16>
    %9 = vector.extract_strided_slice %1 {offsets = [0, 7], sizes = [22, 546], strides = [1, 1]} : vector<22x558xbf16> to vector<22x546xbf16>
    %10 = vector.extract_strided_slice %1 {offsets = [0, 8], sizes = [22, 546], strides = [1, 1]} : vector<22x558xbf16> to vector<22x546xbf16>
    %11 = vector.extract_strided_slice %1 {offsets = [0, 9], sizes = [22, 546], strides = [1, 1]} : vector<22x558xbf16> to vector<22x546xbf16>
    %12 = vector.extract_strided_slice %1 {offsets = [0, 10], sizes = [22, 546], strides = [1, 1]} : vector<22x558xbf16> to vector<22x546xbf16>
    %13 = vector.extract_strided_slice %1 {offsets = [0, 11], sizes = [22, 546], strides = [1, 1]} : vector<22x558xbf16> to vector<22x546xbf16>
    %14 = vector.extract_strided_slice %1 {offsets = [0, 12], sizes = [22, 546], strides = [1, 1]} : vector<22x558xbf16> to vector<22x546xbf16>
    %cst = arith.constant 0.000000e+00 : bf16
    %15 = vector.broadcast %cst : bf16 to vector<2x546xbf16>
    %16 = tpu.concatenate %2, %3, %4, %5, %6, %7, %8, %9, %10, %11, %12, %13, %14, %15 in 0 : vector<22x546xbf16>, vector<22x546xbf16>, vector<22x546xbf16>, vector<22x546xbf16>, vector<22x546xbf16>, vector<22x546xbf16>, vector<22x546xbf16>, vector<22x546xbf16>, vector<22x546xbf16>, vector<22x546xbf16>, vector<22x546xbf16>, vector<22x546xbf16>, vector<22x546xbf16>, vector<2x546xbf16> -> vector<288x546xbf16>
    %c0_2 = arith.constant 0 : index
    %c0_3 = arith.constant 0 : index
    %17 = vector.load %arg2[%c0_2, %c0_3] : memref<40x288xbf16, #tpu.memory_space<vmem>>, vector<40x288xbf16>
    %cst_4 = arith.constant dense<0.000000e+00> : vector<40x546xf32>
    %18 = tpu.matmul %17, %16, %cst_4 {dimension_numbers = #tpu.dot_dimension_numbers<[1], [0], [0], [1], [0, 0, 1, 1], [], []>} : vector<40x288xbf16>, vector<288x546xbf16>, vector<40x546xf32> -> vector<40x546xf32>
    %c0_5 = arith.constant 0 : index
    %c0_6 = arith.constant 0 : index
    %19 = vector.load %arg3[%c0_5, %c0_6] : memref<40x1xf32, #tpu.memory_space<vmem>>, vector<40x1xf32>
    %20 = vector.broadcast %19 : vector<40x1xf32> to vector<40x546xf32>
    %21 = arith.mulf %18, %20 : vector<40x546xf32>
    %c0_7 = arith.constant 0 : index
    %c0_8 = arith.constant 0 : index
    %22 = vector.load %arg4[%c0_7, %c0_8] : memref<40x1xf32, #tpu.memory_space<vmem>>, vector<40x1xf32>
    %23 = vector.broadcast %22 : vector<40x1xf32> to vector<40x546xf32>
    %24 = arith.addf %21, %23 : vector<40x546xf32>
    %25 = arith.mulf %24, %24 : vector<40x546xf32>
    %26 = arith.truncf %25 : vector<40x546xf32> to vector<40x546xbf16>
    %c0_9 = arith.constant 0 : index
    %c0_10 = arith.constant 0 : index
    %27 = vector.load %arg5[%c0_9, %c0_10] : memref<546x74xbf16, #tpu.memory_space<vmem>>, vector<546x74xbf16>
    %cst_11 = arith.constant dense<0.000000e+00> : vector<40x74xf32>
    %28 = tpu.matmul %26, %27, %cst_11 {dimension_numbers = #tpu.dot_dimension_numbers<[1], [0], [0], [1], [0, 0, 1, 1], [], []>} : vector<40x546xbf16>, vector<546x74xbf16>, vector<40x74xf32> -> vector<40x74xf32>
    %cst_12 = arith.constant 0.0285714287 : f32
    %29 = vector.broadcast %cst_12 : f32 to vector<40x74xf32>
    %30 = arith.mulf %28, %29 : vector<40x74xf32>
    %31 = math.log %30 : vector<40x74xf32>
    %c0_13 = arith.constant 0 : index
    %c0_14 = arith.constant 0 : index
    %c0_15 = arith.constant 0 : index
    %32 = vector.load %arg6[%c0_13, %c0_14, %c0_15] : memref<4x40x74xf32, #tpu.memory_space<vmem>>, vector<1x40x74xf32>
    %33 = vector.shape_cast %32 : vector<1x40x74xf32> to vector<40x74xf32>
    %34 = arith.mulf %33, %31 : vector<40x74xf32>
    %cst_16 = arith.constant dense<0.000000e+00> : vector<40xf32>
    %35 = vector.multi_reduction <add>, %34, %cst_16 [1] : vector<40x74xf32> to vector<40xf32>
    %36 = vector.shape_cast %35 : vector<40xf32> to vector<40x1xf32>
    %c1 = arith.constant 1 : index
    %c0_17 = arith.constant 0 : index
    %c0_18 = arith.constant 0 : index
    %37 = vector.load %arg6[%c1, %c0_17, %c0_18] : memref<4x40x74xf32, #tpu.memory_space<vmem>>, vector<1x40x74xf32>
    %38 = vector.shape_cast %37 : vector<1x40x74xf32> to vector<40x74xf32>
    %39 = arith.mulf %38, %31 : vector<40x74xf32>
    %cst_19 = arith.constant dense<0.000000e+00> : vector<40xf32>
    %40 = vector.multi_reduction <add>, %39, %cst_19 [1] : vector<40x74xf32> to vector<40xf32>
    %41 = vector.shape_cast %40 : vector<40xf32> to vector<40x1xf32>
    %c2 = arith.constant 2 : index
    %c0_20 = arith.constant 0 : index
    %c0_21 = arith.constant 0 : index
    %42 = vector.load %arg6[%c2, %c0_20, %c0_21] : memref<4x40x74xf32, #tpu.memory_space<vmem>>, vector<1x40x74xf32>
    %43 = vector.shape_cast %42 : vector<1x40x74xf32> to vector<40x74xf32>
    %44 = arith.mulf %43, %31 : vector<40x74xf32>
    %cst_22 = arith.constant dense<0.000000e+00> : vector<40xf32>
    %45 = vector.multi_reduction <add>, %44, %cst_22 [1] : vector<40x74xf32> to vector<40xf32>
    %46 = vector.shape_cast %45 : vector<40xf32> to vector<40x1xf32>
    %c3 = arith.constant 3 : index
    %c0_23 = arith.constant 0 : index
    %c0_24 = arith.constant 0 : index
    %47 = vector.load %arg6[%c3, %c0_23, %c0_24] : memref<4x40x74xf32, #tpu.memory_space<vmem>>, vector<1x40x74xf32>
    %48 = vector.shape_cast %47 : vector<1x40x74xf32> to vector<40x74xf32>
    %49 = arith.mulf %48, %31 : vector<40x74xf32>
    %cst_25 = arith.constant dense<0.000000e+00> : vector<40xf32>
    %50 = vector.multi_reduction <add>, %49, %cst_25 [1] : vector<40x74xf32> to vector<40xf32>
    %51 = vector.shape_cast %50 : vector<40xf32> to vector<40x1xf32>
    %52 = tpu.concatenate %36, %41, %46, %51 in 1 : vector<40x1xf32>, vector<40x1xf32>, vector<40x1xf32>, vector<40x1xf32> -> vector<40x4xf32>
    %cst_26 = arith.constant dense<0.000000e+00> : vector<4xf32>
    %53 = vector.multi_reduction <add>, %52, %cst_26 [0] : vector<40x4xf32> to vector<4xf32>
    %54 = vector.shape_cast %53 : vector<4xf32> to vector<1x4xf32>
    %c0_27 = arith.constant 0 : index
    %c0_28 = arith.constant 0 : index
    %55 = vector.load %arg7[%c0_27, %c0_28] : memref<1x4xf32, #tpu.memory_space<vmem>>, vector<1x4xf32>
    %56 = arith.addf %54, %55 : vector<1x4xf32>
    %c0_29 = arith.constant 0 : index
    %c0_30 = arith.constant 0 : index
    %c0_31 = arith.constant 0 : index
    %57 = vector.load %arg8[%c0_29, %c0_30, %c0_31] : memref<1x1x4xf32, #tpu.memory_space<vmem>>, vector<1x1x4xf32>
    %58 = vector.shape_cast %57 : vector<1x1x4xf32> to vector<1x4xf32>
    %59 = vector.shape_cast %56 : vector<1x4xf32> to vector<1x1x4xf32>
    tpu.vector_store %arg8[%c0_29, %c0_30, %c0_31], %59 {strides = array<i32>} : memref<1x1x4xf32, #tpu.memory_space<vmem>>, vector<1x1x4xf32>,
    return
  }
  func.func @transform_0(%arg0: i32) -> (i32, i32, i32) {
    %c0_i32 = arith.constant 0 : i32
    %c0_i32_0 = arith.constant 0 : i32
    %c0_i32_1 = arith.constant 0 : i32
    return %arg0, %c0_i32, %c0_i32_0 : i32, i32, i32
  }
  func.func @transform_1(%arg0: i32) -> (i32, i32) {
    %c0_i32 = arith.constant 0 : i32
    %c0_i32_0 = arith.constant 0 : i32
    %c0_i32_1 = arith.constant 0 : i32
    return %c0_i32, %c0_i32_0 : i32, i32
  }
  func.func @transform_2(%arg0: i32) -> (i32, i32) {
    %c0_i32 = arith.constant 0 : i32
    %c0_i32_0 = arith.constant 0 : i32
    %c0_i32_1 = arith.constant 0 : i32
    return %c0_i32, %c0_i32_0 : i32, i32
  }
  func.func @transform_3(%arg0: i32) -> (i32, i32) {
    %c0_i32 = arith.constant 0 : i32
    %c0_i32_0 = arith.constant 0 : i32
    %c0_i32_1 = arith.constant 0 : i32
    return %c0_i32, %c0_i32_0 : i32, i32
  }
  func.func @transform_4(%arg0: i32) -> (i32, i32) {
    %c0_i32 = arith.constant 0 : i32
    %c0_i32_0 = arith.constant 0 : i32
    %c0_i32_1 = arith.constant 0 : i32
    return %c0_i32, %c0_i32_0 : i32, i32
  }
  func.func @transform_5(%arg0: i32) -> (i32, i32, i32) {
    %c0_i32 = arith.constant 0 : i32
    %c0_i32_0 = arith.constant 0 : i32
    %c0_i32_1 = arith.constant 0 : i32
    %c0_i32_2 = arith.constant 0 : i32
    return %c0_i32, %c0_i32_0, %c0_i32_1 : i32, i32, i32
  }
  func.func @transform_6(%arg0: i32) -> (i32, i32) {
    %c0_i32 = arith.constant 0 : i32
    %c0_i32_0 = arith.constant 0 : i32
    %c0_i32_1 = arith.constant 0 : i32
    return %c0_i32, %c0_i32_0 : i32, i32
  }
  func.func @transform_7(%arg0: i32) -> (i32, i32, i32) {
    %c0_i32 = arith.constant 0 : i32
    %c0_i32_0 = arith.constant 0 : i32
    %c0_i32_1 = arith.constant 0 : i32
    return %arg0, %c0_i32, %c0_i32_0 : i32, i32, i32
  }
}

</mosaic_0001>

<llo_original>
// kernel: shallow_conv_net_forward.1
$region0: #{shallow_conv_net_forward.1}
  #allocation0 [shape = 'u32[]', space=smem, size = 0x4, offset = 0x4, fixed_abs, tag = 'smem constant byte address 0x4 - core index']
  #allocation1 [shape = 'u32[144,128]{1,0:T(1,128)}', space=vmem, size = 0x12000, scoped, tag = 'internal scratch']
  %s0 = inlined_call_operand.vmem [shape: bf16[2,22,558], index: 0, kind: input, shape index: {}]
  %s1 = inlined_call_operand.vmem [shape: bf16[40,288], index: 1, kind: input, shape index: {}]
  %s2 = inlined_call_operand.vmem [shape: f32[40,1], index: 2, kind: input, shape index: {}]
  %s3 = inlined_call_operand.vmem [shape: f32[40,1], index: 3, kind: input, shape index: {}]
  %s4 = inlined_call_operand.vmem [shape: bf16[546,74], index: 4, kind: input, shape index: {}]
  %s5 = inlined_call_operand.vmem [shape: f32[4,40,74], index: 5, kind: input, shape index: {}]
  %s6 = inlined_call_operand.vmem [shape: f32[1,4], index: 6, kind: input, shape index: {}]
  %s7 = inlined_call_operand.hbm [shape: f32[2,1,4], index: 7, kind: output, shape index: {}]
  %s8 = sld [smem:[#allocation0]]
  $region61: #{shallow_conv_net_forward.1} parent=0
    _
  %s10 = ssub.s32 1, %s8
  %s11 = scalar_select 0, %s10, %s8
  $region1: #{shallow_conv_net_forward.1} parent=0
    #allocation2 [shape = 'u8[1024]{0}', space=vmem, size = 0x400, scoped, tag = 'output window, operand 0']
    #allocation3 [shape = 's32[2]{0}', space=sflag, size = 0x8, scoped, tag = 'scoped memory for shallow_conv_net_forward.1']
    %12 = vsyncpa [#allocation3], 0
    %s13 = scalar_lea.sflag [#allocation3], 1
    %14 = vsyncpa %s13, 0
    loop: start=0, step=1, limit=4
    $region2: #{shallow_conv_net_forward.1} parent=1 // loop_pre_header
      _
    $region3: #{shallow_conv_net_forward.1} parent=1 // loop_header
      %s16 = sphi 0, %s20
      %p17 = scmp.ge.s32.totalorder %s16, 4
      %s26 = sphi 0, %s28
      %s29 = sphi 0, %s26
      %s30 = sphi 0, %s29
      %s46 = sphi 0, %s30
      %s50 = sphi 0, %s50
      %s52 = sphi 0, %s50
      %s53 = sphi 0, %s52
      %s67 = sphi 0, %s53
      %s71 = sphi 0, %s71
      %s73 = sphi 0, %s71
      %s74 = sphi 0, %s73
      %s88 = sphi 0, %s74
      %s92 = sphi 0, %s92
      %s94 = sphi 0, %s92
      %s95 = sphi 0, %s94
      %s109 = sphi 0, %s95
      %s113 = sphi 0, %s113
      %s115 = sphi 0, %s113
      %s116 = sphi 0, %s115
      %s130 = sphi 0, %s116
      %s134 = sphi 0, %s134
      %s136 = sphi 0, %s134
      %s137 = sphi 0, %s136
      %s151 = sphi 0, %s137
      %s155 = sphi 0, %s155
      %s157 = sphi 0, %s155
      %s158 = sphi 0, %s157
      %s172 = sphi 0, %s158
      %s178 = sphi 0, %s180
      %s181 = sphi 0, %s178
      %s182 = sphi 0, %s181
      %s198 = sphi 0, %s182
    $region4: #{shallow_conv_net_forward.1} parent=1 // loop_header_branch
      %19 = sbr.rel (%p17) target = $region8
    $region5: #{shallow_conv_net_forward.1} parent=1 // loop_body
      %s21 = ssub.s32 %s16, 1
      %s22 = ssub.s32 %s16, 2
      %s23 = sadd.s32 %s16, 1
      %s24 = ssub.s32 %s16, %s23
      %p25 = scmp.eq.s32.totalorder %s24, 0
      %s27 = sadd.s32 %s26, 1
      %s28 = scalar_select %p25, %s26, %s27
      %p31 = pneg %p25
      %p32 = scmp.eq.s32.totalorder %s16, 1
      %p33 = por %p31, %p32
      %p34 = scmp.ne.s32.totalorder %s26, %s29
      %p35 = scmp.eq.s32.totalorder %s16, 0
      %p36 = por %p34, %p35
      %p37 = scmp.ne.s32.totalorder %s26, %s29
      %p38 = scmp.eq.s32.totalorder %s21, 1
      %p39 = por %p37, %p38
      %p40 = scmp.ne.s32.totalorder %s29, %s30
      %p41 = scmp.eq.s32.totalorder %s21, 0
      %p42 = por %p40, %p41
      %p43 = scmp.ne.s32.totalorder %s29, %s30
      %p44 = scmp.eq.s32.totalorder %s22, 1
      %p45 = por %p43, %p44
      %p47 = scmp.ne.s32.totalorder %s30, %s46
      %p48 = scmp.eq.s32.totalorder %s22, 0
      %p49 = por %p47, %p48
      %s51 = sadd.s32 %s50, 1
      %p54 = scmp.eq.s32.totalorder %s16, 1
      %p55 = scmp.ne.s32.totalorder %s50, %s52
      %p56 = scmp.eq.s32.totalorder %s16, 0
      %p57 = por %p55, %p56
      %p58 = scmp.ne.s32.totalorder %s50, %s52
      %p59 = scmp.eq.s32.totalorder %s21, 1
      %p60 = por %p58, %p59
      %p61 = scmp.ne.s32.totalorder %s52, %s53
      %p62 = scmp.eq.s32.totalorder %s21, 0
      %p63 = por %p61, %p62
      %p64 = scmp.ne.s32.totalorder %s52, %s53
      %p65 = scmp.eq.s32.totalorder %s22, 1
      %p66 = por %p64, %p65
      %p68 = scmp.ne.s32.totalorder %s53, %s67
      %p69 = scmp.eq.s32.totalorder %s22, 0
      %p70 = por %p68, %p69
      %s72 = sadd.s32 %s71, 1
      %p75 = scmp.eq.s32.totalorder %s16, 1
      %p76 = scmp.ne.s32.totalorder %s71, %s73
      %p77 = scmp.eq.s32.totalorder %s16, 0
      %p78 = por %p76, %p77
      %p79 = scmp.ne.s32.totalorder %s71, %s73
      %p80 = scmp.eq.s32.totalorder %s21, 1
      %p81 = por %p79, %p80
      %p82 = scmp.ne.s32.totalorder %s73, %s74
      %p83 = scmp.eq.s32.totalorder %s21, 0
      %p84 = por %p82, %p83
      %p85 = scmp.ne.s32.totalorder %s73, %s74
      %p86 = scmp.eq.s32.totalorder %s22, 1
      %p87 = por %p85, %p86
      %p89 = scmp.ne.s32.totalorder %s74, %s88
      %p90 = scmp.eq.s32.totalorder %s22, 0
      %p91 = por %p89, %p90
      %s93 = sadd.s32 %s92, 1
      %p96 = scmp.eq.s32.totalorder %s16, 1
      %p97 = scmp.ne.s32.totalorder %s92, %s94
      %p98 = scmp.eq.s32.totalorder %s16, 0
      %p99 = por %p97, %p98
      %p100 = scmp.ne.s32.totalorder %s92, %s94
      %p101 = scmp.eq.s32.totalorder %s21, 1
      %p102 = por %p100, %p101
      %p103 = scmp.ne.s32.totalorder %s94, %s95
      %p104 = scmp.eq.s32.totalorder %s21, 0
      %p105 = por %p103, %p104
      %p106 = scmp.ne.s32.totalorder %s94, %s95
      %p107 = scmp.eq.s32.totalorder %s22, 1
      %p108 = por %p106, %p107
      %p110 = scmp.ne.s32.totalorder %s95, %s109
      %p111 = scmp.eq.s32.totalorder %s22, 0
      %p112 = por %p110, %p111
      %s114 = sadd.s32 %s113, 1
      %p117 = scmp.eq.s32.totalorder %s16, 1
      %p118 = scmp.ne.s32.totalorder %s113, %s115
      %p119 = scmp.eq.s32.totalorder %s16, 0
      %p120 = por %p118, %p119
      %p121 = scmp.ne.s32.totalorder %s113, %s115
      %p122 = scmp.eq.s32.totalorder %s21, 1
      %p123 = por %p121, %p122
      %p124 = scmp.ne.s32.totalorder %s115, %s116
      %p125 = scmp.eq.s32.totalorder %s21, 0
      %p126 = por %p124, %p125
      %p127 = scmp.ne.s32.totalorder %s115, %s116
      %p128 = scmp.eq.s32.totalorder %s22, 1
      %p129 = por %p127, %p128
      %p131 = scmp.ne.s32.totalorder %s116, %s130
      %p132 = scmp.eq.s32.totalorder %s22, 0
      %p133 = por %p131, %p132
      %s135 = sadd.s32 %s134, 1
      %p138 = scmp.eq.s32.totalorder %s16, 1
      %p139 = scmp.ne.s32.totalorder %s134, %s136
      %p140 = scmp.eq.s32.totalorder %s16, 0
      %p141 = por %p139, %p140
      %p142 = scmp.ne.s32.totalorder %s134, %s136
      %p143 = scmp.eq.s32.totalorder %s21, 1
      %p144 = por %p142, %p143
      %p145 = scmp.ne.s32.totalorder %s136, %s137
      %p146 = scmp.eq.s32.totalorder %s21, 0
      %p147 = por %p145, %p146
      %p148 = scmp.ne.s32.totalorder %s136, %s137
      %p149 = scmp.eq.s32.totalorder %s22, 1
      %p150 = por %p148, %p149
      %p152 = scmp.ne.s32.totalorder %s137, %s151
      %p153 = scmp.eq.s32.totalorder %s22, 0
      %p154 = por %p152, %p153
      %s156 = sadd.s32 %s155, 1
      %p159 = scmp.eq.s32.totalorder %s16, 1
      %p160 = scmp.ne.s32.totalorder %s155, %s157
      %p161 = scmp.eq.s32.totalorder %s16, 0
      %p162 = por %p160, %p161
      %p163 = scmp.ne.s32.totalorder %s155, %s157
      %p164 = scmp.eq.s32.totalorder %s21, 1
      %p165 = por %p163, %p164
      %p166 = scmp.ne.s32.totalorder %s157, %s158
      %p167 = scmp.eq.s32.totalorder %s21, 0
      %p168 = por %p166, %p167
      %p169 = scmp.ne.s32.totalorder %s157, %s158
      %p170 = scmp.eq.s32.totalorder %s22, 1
      %p171 = por %p169, %p170
      %p173 = scmp.ne.s32.totalorder %s158, %s172
      %p174 = scmp.eq.s32.totalorder %s22, 0
      %p175 = por %p173, %p174
      %s176 = ssub.s32 %s16, %s23
      %p177 = scmp.eq.s32.totalorder %s176, 0
      %s179 = sadd.s32 %s178, 1
      %s180 = scalar_select %p177, %s178, %s179
      %p183 = pneg %p177
      %p184 = scmp.eq.s32.totalorder %s16, 1
      %p185 = por %p183, %p184
      %p186 = scmp.ne.s32.totalorder %s178, %s181
      %p187 = scmp.eq.s32.totalorder %s16, 0
      %p188 = por %p186, %p187
      %p189 = scmp.ne.s32.totalorder %s178, %s181
      %p190 = scmp.eq.s32.totalorder %s21, 1
      %p191 = por %p189, %p190
      %p192 = scmp.ne.s32.totalorder %s181, %s182
      %p193 = scmp.eq.s32.totalorder %s21, 0
      %p194 = por %p192, %p193
      %p195 = scmp.ne.s32.totalorder %s181, %s182
      %p196 = scmp.eq.s32.totalorder %s22, 1
      %p197 = por %p195, %p196
      %p199 = scmp.ne.s32.totalorder %s182, %s198
      %p200 = scmp.eq.s32.totalorder %s22, 0
      %p201 = por %p199, %p200
      %p202 = scmp.le.s32.totalorder 1, %s16
      %p203 = scmp.lt.s32.totalorder %s16, 3
      %p204 = pnand %p202, %p203
      %p205 = pneg %p204
      // Predicated region
      $region9: #{shallow_conv_net_forward.1} parent=5 // pred_check
        _
      $region10: #{shallow_conv_net_forward.1} parent=5 // pred_check_branch
        %207 = sbr.rel (%p204) target = $region12
      $region11: #{shallow_conv_net_forward.1} parent=5 // pred_region
        %s208 = ssub.s32 %s16, 1
        // Predicated region
        $region13: #{shallow_conv_net_forward.1} parent=11 // pred_check
          %p209 = pneg %p63
        $region14: #{shallow_conv_net_forward.1} parent=11 // pred_check_branch
          %211 = sbr.rel (%p209) target = $region16
        $region15: #{shallow_conv_net_forward.1} parent=11 // pred_region
          _
        $region16: #{shallow_conv_net_forward.1} parent=11 // pred_fallthru
          _
        // Predicated region
        $region17: #{shallow_conv_net_forward.1} parent=11 // pred_check
          %p212 = pneg %p84
        $region18: #{shallow_conv_net_forward.1} parent=11 // pred_check_branch
          %214 = sbr.rel (%p212) target = $region20
        $region19: #{shallow_conv_net_forward.1} parent=11 // pred_region
          _
        $region20: #{shallow_conv_net_forward.1} parent=11 // pred_fallthru
          _
        // Predicated region
        $region21: #{shallow_conv_net_forward.1} parent=11 // pred_check
          %p215 = pneg %p105
        $region22: #{shallow_conv_net_forward.1} parent=11 // pred_check_branch
          %217 = sbr.rel (%p215) target = $region24
        $region23: #{shallow_conv_net_forward.1} parent=11 // pred_region
          _
        $region24: #{shallow_conv_net_forward.1} parent=11 // pred_fallthru
          _
        // Predicated region
        $region25: #{shallow_conv_net_forward.1} parent=11 // pred_check
          %p218 = pneg %p126
        $region26: #{shallow_conv_net_forward.1} parent=11 // pred_check_branch
          %220 = sbr.rel (%p218) target = $region28
        $region27: #{shallow_conv_net_forward.1} parent=11 // pred_region
          _
        $region28: #{shallow_conv_net_forward.1} parent=11 // pred_fallthru
          _
        // Predicated region
        $region29: #{shallow_conv_net_forward.1} parent=11 // pred_check
          %p221 = pneg %p147
        $region30: #{shallow_conv_net_forward.1} parent=11 // pred_check_branch
          %223 = sbr.rel (%p221) target = $region32
        $region31: #{shallow_conv_net_forward.1} parent=11 // pred_region
          _
        $region32: #{shallow_conv_net_forward.1} parent=11 // pred_fallthru
          _
        // Predicated region
        $region33: #{shallow_conv_net_forward.1} parent=11 // pred_check
          %p224 = pneg %p168
        $region34: #{shallow_conv_net_forward.1} parent=11 // pred_check_branch
          %226 = sbr.rel (%p224) target = $region36
        $region35: #{shallow_conv_net_forward.1} parent=11 // pred_region
          _
        $region36: #{shallow_conv_net_forward.1} parent=11 // pred_fallthru
          _
      $region12: #{shallow_conv_net_forward.1} parent=5 // pred_fallthru
        _
      %p227 = scmp.lt.s32.totalorder %s16, 2
      // Predicated region
      $region37: #{shallow_conv_net_forward.1} parent=5 // pred_check
        %p228 = pneg %p227
      $region38: #{shallow_conv_net_forward.1} parent=5 // pred_check_branch
        %230 = sbr.rel (%p228) target = $region40
      $region39: #{shallow_conv_net_forward.1} parent=5 // pred_region
        // Predicated region
        $region41: #{shallow_conv_net_forward.1} parent=39 // pred_check
          %p231 = pneg %p36
        $region42: #{shallow_conv_net_forward.1} parent=39 // pred_check_branch
          %233 = sbr.rel (%p231) target = $region44
        $region43: #{shallow_conv_net_forward.1} parent=39 // pred_region
          %p234 = scmp.lt.s32.totalorder %s16, 1
          %s235 = scalar_select %p234, %s16, 1
          %s236 = smul.addr %s235, 15
          %s237 = smul.addr %s236, 4
          %s238 = scalar_lea.vmem %s0, %s237
        $region44: #{shallow_conv_net_forward.1} parent=39 // pred_fallthru
          _
      $region40: #{shallow_conv_net_forward.1} parent=5 // pred_fallthru
        _
      %p239 = scmp.le.s32.totalorder 1, %s16
      %p240 = scmp.lt.s32.totalorder %s16, 3
      %p241 = pnand %p239, %p240
      %p242 = pneg %p241
      // Predicated region
      $region45: #{shallow_conv_net_forward.1} parent=5 // pred_check
        _
      $region46: #{shallow_conv_net_forward.1} parent=5 // pred_check_branch
        %244 = sbr.rel (%p241) target = $region48
      $region47: #{shallow_conv_net_forward.1} parent=5 // pred_region
        %s245 = ssub.s32 %s16, 1
        %p246 = scmp.lt.s32.totalorder %s21, 1
        %s247 = scalar_select %p246, %s21, 1
        %s248 = smul.addr %s247, 15
        %s249 = smul.addr %s248, 4
        %s250 = scalar_lea.vmem %s0, %s249
        %p251 = pneg %p42
        %p252 = pneg %p39
        %p253 = pneg %p63
        %p254 = pneg %p60
        %p255 = pneg %p84
        %p256 = pneg %p81
        %p257 = pneg %p105
        %p258 = pneg %p102
        %p259 = pneg %p126
        %p260 = pneg %p123
        %p261 = pneg %p147
        %p262 = pneg %p144
        %p263 = pneg %p168
        %p264 = pneg %p165
        %p265 = pneg %p194
        %p266 = pneg %p191
        %s267 = sand.u32 %s181, 1
        %s268 = scalar_lea.sflag [#allocation3], %s267
        %s269 = sand.u32 %s181, 1
        %s270 = scalar_lea.vmem [#allocation2], %s269
        %p271 = scmp.lt.s32.totalorder %s21, 1
        %s272 = scalar_select %p271, %s21, 1
        %s273 = smul.addr %s272, 15
        %s274 = smul.addr %s273, 4
        %s275 = scalar_lea.vmem %s0, %s274
        %v277 = vld [vmem:[%s275] sm:$0xff]
        %v278 = vld [vmem:[%s275 + $0x8] sm:$0xff]
        %v279 = vld [vmem:[%s275 + $0x10] sm:$0xf]
        %v280 = vld [vmem:[%s275 + $0x14] sm:$0xff]
        %v281 = vld [vmem:[%s275 + $0x1c] sm:$0xff]
        %v282 = vld [vmem:[%s275 + $0x24] sm:$0xf]
        %v283 = vld [vmem:[%s275 + $0x28] sm:$0x77]
        %v284 = vld [vmem:[%s275 + $0x30] sm:$0x77]
        %v285 = vld [vmem:[%s275 + $0x38] sm:$0x7]
        %v295 = vunpack.c.l.b16 %v277
        %v296 = vunpack.c.h.b16 %v277
        %v297 = vunpack.c.l.b16 %v278
        %v298 = vunpack.c.h.b16 %v278
        %v299 = vunpack.c.l.b16 %v279
        %v300 = vunpack.c.l.b16 %v280
        %v301 = vunpack.c.h.b16 %v280
        %v302 = vunpack.c.l.b16 %v281
        %v303 = vunpack.c.h.b16 %v281
        %v304 = vunpack.c.l.b16 %v282
        %v305 = vunpack.c.l.b16 %v283
        %v306 = vunpack.c.h.b16 %v283
        %v307 = vunpack.c.l.b16 %v284
        %v308 = vunpack.c.h.b16 %v284
        %v309 = vunpack.c.l.b16 %v285
        %v310 = vpack.c.b16 %v300, %v295
        %v311 = vpack.c.b16 %v301, %v296
        %v312 = vpack.c.b16 %v302, %v297
        %v313 = vpack.c.b16 %v303, %v298
        %v314 = vpack.c.b16 %v304, %v299
        %v315 = vpack.c.b16 %v305, %v305
        %v316 = vpack.c.b16 %v306, %v306
        %v317 = vpack.c.b16 %v307, %v307
        %v318 = vpack.c.b16 %v308, %v308
        %v319 = vpack.c.b16 %v309, %v309
        %vm325 = vcmask 1042432
        %v326 = vrot.slane %v310, 5
        %v327 = vrot.slane %v311, 5
        %v328 = vrot.slane %v312, 5
        %v329 = vrot.slane %v313, 5
        %v330 = vrot.slane %v314, 5
        %v331 = vrot.slane %v315, 5
        %v332 = vsel %vm325, %v326, %v331
        %v333 = vrot.slane %v316, 5
        %v334 = vsel %vm325, %v327, %v333
        %v335 = vrot.slane %v317, 5
        %v336 = vsel %vm325, %v328, %v335
        %v337 = vrot.slane %v318, 5
        %v338 = vsel %vm325, %v329, %v337
        %v339 = vrot.slane %v319, 5
        %v340 = vsel %vm325, %v330, %v339
        %341 = vrot.lane.b32.xlu0 %v326, 127
        %v342 = vpop.permute.xlu0 %341
        %343 = vrot.lane.b32.xlu0 %v327, 127
        %v344 = vpop.permute.xlu0 %343
        %345 = vrot.lane.b32.xlu0 %v328, 127
        %v346 = vpop.permute.xlu0 %345
        %347 = vrot.lane.b32.xlu0 %v329, 127
        %v348 = vpop.permute.xlu0 %347
        %349 = vrot.lane.b32.xlu0 %v330, 127
        %v350 = vpop.permute.xlu0 %349
        %351 = vrot.lane.b32.xlu0 %v332, 127
        %v352 = vpop.permute.xlu0 %351
        %353 = vrot.lane.b32.xlu0 %v334, 127
        %v354 = vpop.permute.xlu0 %353
        %355 = vrot.lane.b32.xlu0 %v336, 127
        %v356 = vpop.permute.xlu0 %355
        %357 = vrot.lane.b32.xlu0 %v338, 127
        %v358 = vpop.permute.xlu0 %357
        %359 = vrot.lane.b32.xlu0 %v340, 127
        %v360 = vpop.permute.xlu0 %359
        %vm361 = vcmask 1039360
        %v362 = vsel %vm361, %v342, %v344
        %v363 = vsel %vm361, %v344, %v346
        %v364 = vsel %vm361, %v346, %v348
        %v365 = vsel %vm361, %v348, %v350
        %v366 = vsel %vm361, %v352, %v354
        %v367 = vsel %vm361, %v354, %v356
        %v368 = vsel %vm361, %v356, %v358
        %v369 = vsel %vm361, %v358, %v360
        %vm370 = vcmask 1045504
        %v371 = vrot.slane %v310, 2
        %v372 = vrot.slane %v311, 2
        %v373 = vrot.slane %v312, 2
        %v374 = vrot.slane %v313, 2
        %v375 = vrot.slane %v314, 2
        %v376 = vrot.slane %v315, 2
        %v377 = vsel %vm370, %v371, %v376
        %v378 = vrot.slane %v316, 2
        %v379 = vsel %vm370, %v372, %v378
        %v380 = vrot.slane %v317, 2
        %v381 = vsel %vm370, %v373, %v380
        %v382 = vrot.slane %v318, 2
        %v383 = vsel %vm370, %v374, %v382
        %v384 = vrot.slane %v319, 2
        %v385 = vsel %vm370, %v375, %v384
        %386 = vrot.lane.b32.xlu0 %v371, 126
        %v387 = vpop.permute.xlu0 %386
        %388 = vrot.lane.b32.xlu0 %v372, 126
        %v389 = vpop.permute.xlu0 %388
        %390 = vrot.lane.b32.xlu0 %v373, 126
        %v391 = vpop.permute.xlu0 %390
        %392 = vrot.lane.b32.xlu0 %v374, 126
        %v393 = vpop.permute.xlu0 %392
        %394 = vrot.lane.b32.xlu0 %v375, 126
        %v395 = vpop.permute.xlu0 %394
        %396 = vrot.lane.b32.xlu0 %v377, 126
        %v397 = vpop.permute.xlu0 %396
        %398 = vrot.lane.b32.xlu0 %v379, 126
        %v399 = vpop.permute.xlu0 %398
        %400 = vrot.lane.b32.xlu0 %v381, 126
        %v401 = vpop.permute.xlu0 %400
        %402 = vrot.lane.b32.xlu0 %v383, 126
        %v403 = vpop.permute.xlu0 %402
        %404 = vrot.lane.b32.xlu0 %v385, 126
        %v405 = vpop.permute.xlu0 %404
        %406 = vrot.lane.b32.xlu0 %v376, 126
        %v407 = vpop.permute.xlu0 %406
        %408 = vrot.lane.b32.xlu0 %v378, 126
        %v409 = vpop.permute.xlu0 %408
        %410 = vrot.lane.b32.xlu0 %v380, 126
        %v411 = vpop.permute.xlu0 %410
        %412 = vrot.lane.b32.xlu0 %v382, 126
        %v413 = vpop.permute.xlu0 %412
        %414 = vrot.lane.b32.xlu0 %v384, 126
        %v415 = vpop.permute.xlu0 %414
        %vm416 = vcmask 1031168
        %v417 = vsel %vm416, %v387, %v389
        %v418 = vsel %vm416, %v389, %v391
        %v419 = vsel %vm416, %v391, %v393
        %v420 = vsel %vm416, %v393, %v395
        %v421 = vsel %vm416, %v397, %v399
        %v422 = vsel %vm416, %v399, %v401
        %v423 = vsel %vm416, %v401, %v403
        %v424 = vsel %vm416, %v403, %v405
        %v425 = vsel %vm416, %v407, %v409
        %v426 = vsel %vm416, %v409, %v411
        %v427 = vsel %vm416, %v411, %v413
        %v428 = vsel %vm416, %v413, %v415
        %vm434 = vcmask 1040384
        %v435 = vrot.slane %v310, 7
        %v436 = vrot.slane %v311, 7
        %v437 = vrot.slane %v312, 7
        %v438 = vrot.slane %v313, 7
        %v439 = vrot.slane %v314, 7
        %v440 = vrot.slane %v315, 7
        %v441 = vsel %vm434, %v435, %v440
        %v442 = vrot.slane %v316, 7
        %v443 = vsel %vm434, %v436, %v442
        %v444 = vrot.slane %v317, 7
        %v445 = vsel %vm434, %v437, %v444
        %v446 = vrot.slane %v318, 7
        %v447 = vsel %vm434, %v438, %v446
        %v448 = vrot.slane %v319, 7
        %v449 = vsel %vm434, %v439, %v448
        %450 = vrot.lane.b32.xlu0 %v435, 125
        %v451 = vpop.permute.xlu0 %450
        %452 = vrot.lane.b32.xlu0 %v436, 125
        %v453 = vpop.permute.xlu0 %452
        %454 = vrot.lane.b32.xlu0 %v437, 125
        %v455 = vpop.permute.xlu0 %454
        %456 = vrot.lane.b32.xlu0 %v438, 125
        %v457 = vpop.permute.xlu0 %456
        %458 = vrot.lane.b32.xlu0 %v439, 125
        %v459 = vpop.permute.xlu0 %458
        %460 = vrot.lane.b32.xlu0 %v441, 125
        %v461 = vpop.permute.xlu0 %460
        %462 = vrot.lane.b32.xlu0 %v443, 125
        %v463 = vpop.permute.xlu0 %462
        %464 = vrot.lane.b32.xlu0 %v445, 125
        %v465 = vpop.permute.xlu0 %464
        %466 = vrot.lane.b32.xlu0 %v447, 125
        %v467 = vpop.permute.xlu0 %466
        %468 = vrot.lane.b32.xlu0 %v449, 125
        %v469 = vpop.permute.xlu0 %468
        %vm470 = vcmask 1022976
        %v471 = vsel %vm470, %v451, %v453
        %v472 = vsel %vm470, %v453, %v455
        %v473 = vsel %vm470, %v455, %v457
        %v474 = vsel %vm470, %v457, %v459
        %v475 = vsel %vm470, %v461, %v463
        %v476 = vsel %vm470, %v463, %v465
        %v477 = vsel %vm470, %v465, %v467
        %v478 = vsel %vm470, %v467, %v469
        %v479 = vpack.c.b16 %v295, %v295
        %v480 = vpack.c.b16 %v296, %v296
        %v481 = vpack.c.b16 %v297, %v297
        %v482 = vpack.c.b16 %v298, %v298
        %v483 = vpack.c.b16 %v299, %v299
        %v484 = vpack.c.b16 %v305, %v300
        %v485 = vpack.c.b16 %v306, %v301
        %v486 = vpack.c.b16 %v307, %v302
        %v487 = vpack.c.b16 %v308, %v303
        %v488 = vpack.c.b16 %v309, %v304
        %489 = vrot.lane.b32.xlu0 %v479, 124
        %v490 = vpop.permute.xlu0 %489
        %491 = vrot.lane.b32.xlu0 %v480, 124
        %v492 = vpop.permute.xlu0 %491
        %493 = vrot.lane.b32.xlu0 %v481, 124
        %v494 = vpop.permute.xlu0 %493
        %495 = vrot.lane.b32.xlu0 %v482, 124
        %v496 = vpop.permute.xlu0 %495
        %497 = vrot.lane.b32.xlu0 %v483, 124
        %v498 = vpop.permute.xlu0 %497
        %499 = vrot.lane.b32.xlu0 %v484, 124
        %v500 = vpop.permute.xlu0 %499
        %501 = vrot.lane.b32.xlu0 %v485, 124
        %v502 = vpop.permute.xlu0 %501
        %503 = vrot.lane.b32.xlu0 %v486, 124
        %v504 = vpop.permute.xlu0 %503
        %505 = vrot.lane.b32.xlu0 %v487, 124
        %v506 = vpop.permute.xlu0 %505
        %507 = vrot.lane.b32.xlu0 %v488, 124
        %v508 = vpop.permute.xlu0 %507
        %vm509 = vcmask 1014784
        %v510 = vsel %vm509, %v490, %v492
        %v511 = vsel %vm509, %v492, %v494
        %v512 = vsel %vm509, %v494, %v496
        %v513 = vsel %vm509, %v496, %v498
        %v514 = vsel %vm509, %v500, %v502
        %v515 = vsel %vm509, %v502, %v504
        %v516 = vsel %vm509, %v504, %v506
        %v517 = vsel %vm509, %v506, %v508
        %vm518 = vcmask 1046528
        %v519 = vrot.slane %v310, 1
        %v520 = vrot.slane %v311, 1
        %v521 = vrot.slane %v312, 1
        %v522 = vrot.slane %v313, 1
        %v523 = vrot.slane %v314, 1
        %v524 = vrot.slane %v315, 1
        %v525 = vsel %vm518, %v519, %v524
        %v526 = vrot.slane %v316, 1
        %v527 = vsel %vm518, %v520, %v526
        %v528 = vrot.slane %v317, 1
        %v529 = vsel %vm518, %v521, %v528
        %v530 = vrot.slane %v318, 1
        %v531 = vsel %vm518, %v522, %v530
        %v532 = vrot.slane %v319, 1
        %v533 = vsel %vm518, %v523, %v532
        %534 = vrot.lane.b32.xlu0 %v519, 123
        %v535 = vpop.permute.xlu0 %534
        %536 = vrot.lane.b32.xlu0 %v520, 123
        %v537 = vpop.permute.xlu0 %536
        %538 = vrot.lane.b32.xlu0 %v521, 123
        %v539 = vpop.permute.xlu0 %538
        %540 = vrot.lane.b32.xlu0 %v522, 123
        %v541 = vpop.permute.xlu0 %540
        %542 = vrot.lane.b32.xlu0 %v523, 123
        %v543 = vpop.permute.xlu0 %542
        %544 = vrot.lane.b32.xlu0 %v525, 123
        %v545 = vpop.permute.xlu0 %544
        %546 = vrot.lane.b32.xlu0 %v527, 123
        %v547 = vpop.permute.xlu0 %546
        %548 = vrot.lane.b32.xlu0 %v529, 123
        %v549 = vpop.permute.xlu0 %548
        %550 = vrot.lane.b32.xlu0 %v531, 123
        %v551 = vpop.permute.xlu0 %550
        %552 = vrot.lane.b32.xlu0 %v533, 123
        %v553 = vpop.permute.xlu0 %552
        %554 = vrot.lane.b32.xlu0 %v524, 123
        %v555 = vpop.permute.xlu0 %554
        %556 = vrot.lane.b32.xlu0 %v526, 123
        %v557 = vpop.permute.xlu0 %556
        %558 = vrot.lane.b32.xlu0 %v528, 123
        %v559 = vpop.permute.xlu0 %558
        %560 = vrot.lane.b32.xlu0 %v530, 123
        %v561 = vpop.permute.xlu0 %560
        %562 = vrot.lane.b32.xlu0 %v532, 123
        %v563 = vpop.permute.xlu0 %562
        %vm564 = vcmask 1006592
        %v565 = vsel %vm564, %v535, %v537
        %v566 = vsel %vm564, %v537, %v539
        %v567 = vsel %vm564, %v539, %v541
        %v568 = vsel %vm564, %v541, %v543
        %v569 = vsel %vm564, %v545, %v547
        %v570 = vsel %vm564, %v547, %v549
        %v571 = vsel %vm564, %v549, %v551
        %v572 = vsel %vm564, %v551, %v553
        %v573 = vsel %vm564, %v555, %v557
        %v574 = vsel %vm564, %v557, %v559
        %v575 = vsel %vm564, %v559, %v561
        %v576 = vsel %vm564, %v561, %v563
        %vm582 = vcmask 1041408
        %v583 = vrot.slane %v310, 6
        %v584 = vrot.slane %v311, 6
        %v585 = vrot.slane %v312, 6
        %v586 = vrot.slane %v313, 6
        %v587 = vrot.slane %v314, 6
        %v588 = vrot.slane %v315, 6
        %v589 = vsel %vm582, %v583, %v588
        %v590 = vrot.slane %v316, 6
        %v591 = vsel %vm582, %v584, %v590
        %v592 = vrot.slane %v317, 6
        %v593 = vsel %vm582, %v585, %v592
        %v594 = vrot.slane %v318, 6
        %v595 = vsel %vm582, %v586, %v594
        %v596 = vrot.slane %v319, 6
        %v597 = vsel %vm582, %v587, %v596
        %598 = vrot.lane.b32.xlu0 %v583, 122
        %v599 = vpop.permute.xlu0 %598
        %600 = vrot.lane.b32.xlu0 %v584, 122
        %v601 = vpop.permute.xlu0 %600
        %602 = vrot.lane.b32.xlu0 %v585, 122
        %v603 = vpop.permute.xlu0 %602
        %604 = vrot.lane.b32.xlu0 %v586, 122
        %v605 = vpop.permute.xlu0 %604
        %606 = vrot.lane.b32.xlu0 %v587, 122
        %v607 = vpop.permute.xlu0 %606
        %608 = vrot.lane.b32.xlu0 %v589, 122
        %v609 = vpop.permute.xlu0 %608
        %610 = vrot.lane.b32.xlu0 %v591, 122
        %v611 = vpop.permute.xlu0 %610
        %612 = vrot.lane.b32.xlu0 %v593, 122
        %v613 = vpop.permute.xlu0 %612
        %614 = vrot.lane.b32.xlu0 %v595, 122
        %v615 = vpop.permute.xlu0 %614
        %616 = vrot.lane.b32.xlu0 %v597, 122
        %v617 = vpop.permute.xlu0 %616
        %vm618 = vcmask 998400
        %v619 = vsel %vm618, %v599, %v601
        %v620 = vsel %vm618, %v601, %v603
        %v621 = vsel %vm618, %v603, %v605
        %v622 = vsel %vm618, %v605, %v607
        %v623 = vsel %vm618, %v609, %v611
        %v624 = vsel %vm618, %v611, %v613
        %v625 = vsel %vm618, %v613, %v615
        %v626 = vsel %vm618, %v615, %v617
        %vm627 = vcmask 1044480
        %v628 = vrot.slane %v310, 3
        %v629 = vrot.slane %v311, 3
        %v630 = vrot.slane %v312, 3
        %v631 = vrot.slane %v313, 3
        %v632 = vrot.slane %v314, 3
        %v633 = vrot.slane %v315, 3
        %v634 = vsel %vm627, %v628, %v633
        %v635 = vrot.slane %v316, 3
        %v636 = vsel %vm627, %v629, %v635
        %v637 = vrot.slane %v317, 3
        %v638 = vsel %vm627, %v630, %v637
        %v639 = vrot.slane %v318, 3
        %v640 = vsel %vm627, %v631, %v639
        %v641 = vrot.slane %v319, 3
        %v642 = vsel %vm627, %v632, %v641
        %643 = vrot.lane.b32.xlu0 %v628, 121
        %v644 = vpop.permute.xlu0 %643
        %645 = vrot.lane.b32.xlu0 %v629, 121
        %v646 = vpop.permute.xlu0 %645
        %647 = vrot.lane.b32.xlu0 %v630, 121
        %v648 = vpop.permute.xlu0 %647
        %649 = vrot.lane.b32.xlu0 %v631, 121
        %v650 = vpop.permute.xlu0 %649
        %651 = vrot.lane.b32.xlu0 %v632, 121
        %v652 = vpop.permute.xlu0 %651
        %653 = vrot.lane.b32.xlu0 %v634, 121
        %v654 = vpop.permute.xlu0 %653
        %655 = vrot.lane.b32.xlu0 %v636, 121
        %v656 = vpop.permute.xlu0 %655
        %657 = vrot.lane.b32.xlu0 %v638, 121
        %v658 = vpop.permute.xlu0 %657
        %659 = vrot.lane.b32.xlu0 %v640, 121
        %v660 = vpop.permute.xlu0 %659
        %661 = vrot.lane.b32.xlu0 %v642, 121
        %v662 = vpop.permute.xlu0 %661
        %vm663 = vcmask 990208
        %v664 = vsel %vm663, %v644, %v646
        %v665 = vsel %vm663, %v646, %v648
        %v666 = vsel %vm663, %v648, %v650
        %v667 = vsel %vm663, %v650, %v652
        %v668 = vsel %vm663, %v654, %v656
        %v669 = vsel %vm663, %v656, %v658
        %v670 = vsel %vm663, %v658, %v660
        %v671 = vsel %vm663, %v660, %v662
        %677 = vrot.lane.b32.xlu0 %v310, 120
        %v678 = vpop.permute.xlu0 %677
        %679 = vrot.lane.b32.xlu0 %v311, 120
        %v680 = vpop.permute.xlu0 %679
        %681 = vrot.lane.b32.xlu0 %v312, 120
        %v682 = vpop.permute.xlu0 %681
        %683 = vrot.lane.b32.xlu0 %v313, 120
        %v684 = vpop.permute.xlu0 %683
        %685 = vrot.lane.b32.xlu0 %v314, 120
        %v686 = vpop.permute.xlu0 %685
        %687 = vrot.lane.b32.xlu0 %v315, 120
        %v688 = vpop.permute.xlu0 %687
        %689 = vrot.lane.b32.xlu0 %v316, 120
        %v690 = vpop.permute.xlu0 %689
        %691 = vrot.lane.b32.xlu0 %v317, 120
        %v692 = vpop.permute.xlu0 %691
        %693 = vrot.lane.b32.xlu0 %v318, 120
        %v694 = vpop.permute.xlu0 %693
        %695 = vrot.lane.b32.xlu0 %v319, 120
        %v696 = vpop.permute.xlu0 %695
        %vm697 = vcmask 982016
        %v698 = vsel %vm697, %v678, %v680
        %v699 = vsel %vm697, %v680, %v682
        %v700 = vsel %vm697, %v682, %v684
        %v701 = vsel %vm697, %v684, %v686
        %v702 = vsel %vm697, %v688, %v690
        %v703 = vsel %vm697, %v690, %v692
        %v704 = vsel %vm697, %v692, %v694
        %v705 = vsel %vm697, %v694, %v696
        %711 = vrot.lane.b32.xlu0 %v326, 119
        %v712 = vpop.permute.xlu0 %711
        %713 = vrot.lane.b32.xlu0 %v327, 119
        %v714 = vpop.permute.xlu0 %713
        %715 = vrot.lane.b32.xlu0 %v328, 119
        %v716 = vpop.permute.xlu0 %715
        %717 = vrot.lane.b32.xlu0 %v329, 119
        %v718 = vpop.permute.xlu0 %717
        %719 = vrot.lane.b32.xlu0 %v330, 119
        %v720 = vpop.permute.xlu0 %719
        %721 = vrot.lane.b32.xlu0 %v332, 119
        %v722 = vpop.permute.xlu0 %721
        %723 = vrot.lane.b32.xlu0 %v334, 119
        %v724 = vpop.permute.xlu0 %723
        %725 = vrot.lane.b32.xlu0 %v336, 119
        %v726 = vpop.permute.xlu0 %725
        %727 = vrot.lane.b32.xlu0 %v338, 119
        %v728 = vpop.permute.xlu0 %727
        %729 = vrot.lane.b32.xlu0 %v340, 119
        %v730 = vpop.permute.xlu0 %729
        %vm731 = vcmask 973824
        %v732 = vsel %vm731, %v712, %v714
        %v733 = vsel %vm731, %v714, %v716
        %v734 = vsel %vm731, %v716, %v718
        %v735 = vsel %vm731, %v718, %v720
        %v736 = vsel %vm731, %v722, %v724
        %v737 = vsel %vm731, %v724, %v726
        %v738 = vsel %vm731, %v726, %v728
        %v739 = vsel %vm731, %v728, %v730
        %740 = vrot.lane.b32.xlu0 %v371, 118
        %v741 = vpop.permute.xlu0 %740
        %742 = vrot.lane.b32.xlu0 %v372, 118
        %v743 = vpop.permute.xlu0 %742
        %744 = vrot.lane.b32.xlu0 %v373, 118
        %v745 = vpop.permute.xlu0 %744
        %746 = vrot.lane.b32.xlu0 %v374, 118
        %v747 = vpop.permute.xlu0 %746
        %748 = vrot.lane.b32.xlu0 %v375, 118
        %v749 = vpop.permute.xlu0 %748
        %750 = vrot.lane.b32.xlu0 %v377, 118
        %v751 = vpop.permute.xlu0 %750
        %752 = vrot.lane.b32.xlu0 %v379, 118
        %v753 = vpop.permute.xlu0 %752
        %754 = vrot.lane.b32.xlu0 %v381, 118
        %v755 = vpop.permute.xlu0 %754
        %756 = vrot.lane.b32.xlu0 %v383, 118
        %v757 = vpop.permute.xlu0 %756
        %758 = vrot.lane.b32.xlu0 %v385, 118
        %v759 = vpop.permute.xlu0 %758
        %760 = vrot.lane.b32.xlu0 %v376, 118
        %v761 = vpop.permute.xlu0 %760
        %762 = vrot.lane.b32.xlu0 %v378, 118
        %v763 = vpop.permute.xlu0 %762
        %764 = vrot.lane.b32.xlu0 %v380, 118
        %v765 = vpop.permute.xlu0 %764
        %766 = vrot.lane.b32.xlu0 %v382, 118
        %v767 = vpop.permute.xlu0 %766
        %768 = vrot.lane.b32.xlu0 %v384, 118
        %v769 = vpop.permute.xlu0 %768
        %vm770 = vcmask 965632
        %v771 = vsel %vm770, %v741, %v743
        %v772 = vsel %vm770, %v743, %v745
        %v773 = vsel %vm770, %v745, %v747
        %v774 = vsel %vm770, %v747, %v749
        %v775 = vsel %vm770, %v751, %v753
        %v776 = vsel %vm770, %v753, %v755
        %v777 = vsel %vm770, %v755, %v757
        %v778 = vsel %vm770, %v757, %v759
        %v779 = vsel %vm770, %v761, %v763
        %v780 = vsel %vm770, %v763, %v765
        %v781 = vsel %vm770, %v765, %v767
        %v782 = vsel %vm770, %v767, %v769
        %788 = vrot.lane.b32.xlu0 %v435, 117
        %v789 = vpop.permute.xlu0 %788
        %790 = vrot.lane.b32.xlu0 %v436, 117
        %v791 = vpop.permute.xlu0 %790
        %792 = vrot.lane.b32.xlu0 %v437, 117
        %v793 = vpop.permute.xlu0 %792
        %794 = vrot.lane.b32.xlu0 %v438, 117
        %v795 = vpop.permute.xlu0 %794
        %796 = vrot.lane.b32.xlu0 %v439, 117
        %v797 = vpop.permute.xlu0 %796
        %798 = vrot.lane.b32.xlu0 %v441, 117
        %v799 = vpop.permute.xlu0 %798
        %800 = vrot.lane.b32.xlu0 %v443, 117
        %v801 = vpop.permute.xlu0 %800
        %802 = vrot.lane.b32.xlu0 %v445, 117
        %v803 = vpop.permute.xlu0 %802
        %804 = vrot.lane.b32.xlu0 %v447, 117
        %v805 = vpop.permute.xlu0 %804
        %806 = vrot.lane.b32.xlu0 %v449, 117
        %v807 = vpop.permute.xlu0 %806
        %vm808 = vcmask 957440
        %v809 = vsel %vm808, %v789, %v791
        %v810 = vsel %vm808, %v791, %v793
        %v811 = vsel %vm808, %v793, %v795
        %v812 = vsel %vm808, %v795, %v797
        %v813 = vsel %vm808, %v799, %v801
        %v814 = vsel %vm808, %v801, %v803
        %v815 = vsel %vm808, %v803, %v805
        %v816 = vsel %vm808, %v805, %v807
        %817 = vrot.lane.b32.xlu0 %v479, 116
        %v818 = vpop.permute.xlu0 %817
        %819 = vrot.lane.b32.xlu0 %v480, 116
        %v820 = vpop.permute.xlu0 %819
        %821 = vrot.lane.b32.xlu0 %v481, 116
        %v822 = vpop.permute.xlu0 %821
        %823 = vrot.lane.b32.xlu0 %v482, 116
        %v824 = vpop.permute.xlu0 %823
        %825 = vrot.lane.b32.xlu0 %v483, 116
        %v826 = vpop.permute.xlu0 %825
        %827 = vrot.lane.b32.xlu0 %v484, 116
        %v828 = vpop.permute.xlu0 %827
        %829 = vrot.lane.b32.xlu0 %v485, 116
        %v830 = vpop.permute.xlu0 %829
        %831 = vrot.lane.b32.xlu0 %v486, 116
        %v832 = vpop.permute.xlu0 %831
        %833 = vrot.lane.b32.xlu0 %v487, 116
        %v834 = vpop.permute.xlu0 %833
        %835 = vrot.lane.b32.xlu0 %v488, 116
        %v836 = vpop.permute.xlu0 %835
        %vm837 = vcmask 949248
        %v838 = vsel %vm837, %v818, %v820
        %v839 = vsel %vm837, %v820, %v822
        %v840 = vsel %vm837, %v822, %v824
        %v841 = vsel %vm837, %v824, %v826
        %v842 = vsel %vm837, %v828, %v830
        %v843 = vsel %vm837, %v830, %v832
        %v844 = vsel %vm837, %v832, %v834
        %v845 = vsel %vm837, %v834, %v836
        %vm846 = vcmask 1042432
        %v849 = vsel %vm846, %v315, %v362
        %v853 = vsel %vm846, %v316, %v363
        %v857 = vsel %vm846, %v317, %v364
        %v861 = vsel %vm846, %v318, %v365
        %v865 = vsel %vm846, %v319, %v350
        %vm867 = vcmask 1045504
        %v870 = vsel %vm867, %v366, %v417
        %v874 = vsel %vm867, %v367, %v418
        %v878 = vsel %vm867, %v368, %v419
        %v882 = vsel %vm867, %v369, %v420
        %v886 = vsel %vm867, %v360, %v395
        %vm888 = vcmask 1040384
        %v891 = vsel %vm888, %v425, %v471
        %v895 = vsel %vm888, %v426, %v472
        %v899 = vsel %vm888, %v427, %v473
        %v903 = vsel %vm888, %v428, %v474
        %v907 = vsel %vm888, %v415, %v459
        %vm909 = vcmask 1043456
        %v912 = vsel %vm909, %v475, %v510
        %v916 = vsel %vm909, %v476, %v511
        %v920 = vsel %vm909, %v477, %v512
        %v924 = vsel %vm909, %v478, %v513
        %v928 = vsel %vm909, %v469, %v498
        %vm930 = vcmask 1046528
        %v933 = vsel %vm930, %v514, %v565
        %v937 = vsel %vm930, %v515, %v566
        %v941 = vsel %vm930, %v516, %v567
        %v945 = vsel %vm930, %v517, %v568
        %v949 = vsel %vm930, %v508, %v543
        %vm951 = vcmask 1041408
        %v954 = vsel %vm951, %v573, %v619
        %v958 = vsel %vm951, %v574, %v620
        %v962 = vsel %vm951, %v575, %v621
        %v966 = vsel %vm951, %v576, %v622
        %v970 = vsel %vm951, %v563, %v607
        %vm972 = vcmask 1044480
        %v975 = vsel %vm972, %v623, %v664
        %v979 = vsel %vm972, %v624, %v665
        %v983 = vsel %vm972, %v625, %v666
        %v987 = vsel %vm972, %v626, %v667
        %v991 = vsel %vm972, %v617, %v652
        %v995 = vsel %vm846, %v702, %v732
        %v999 = vsel %vm846, %v703, %v733
        %v1003 = vsel %vm846, %v704, %v734
        %v1007 = vsel %vm846, %v705, %v735
        %v1011 = vsel %vm846, %v696, %v720
        %v1015 = vsel %vm867, %v736, %v771
        %v1019 = vsel %vm867, %v737, %v772
        %v1023 = vsel %vm867, %v738, %v773
        %v1027 = vsel %vm867, %v739, %v774
        %v1031 = vsel %vm867, %v730, %v749
        %v1035 = vsel %vm888, %v779, %v809
        %v1039 = vsel %vm888, %v780, %v810
        %v1043 = vsel %vm888, %v781, %v811
        %v1047 = vsel %vm888, %v782, %v812
        %v1051 = vsel %vm888, %v769, %v797
        %v1055 = vsel %vm909, %v813, %v838
        %v1059 = vsel %vm909, %v814, %v839
        %v1063 = vsel %vm909, %v815, %v840
        %v1067 = vsel %vm909, %v816, %v841
        %v1071 = vsel %vm909, %v807, %v826
        %v1075 = vsel %vm930, %v842, 0
        %v1078 = vsel %vm930, %v843, 0
        %v1081 = vsel %vm930, %v844, 0
        %v1084 = vsel %vm930, %v845, 0
        %v1087 = vsel %vm930, %v836, 0
        %v1089 = vld [vmem:[%s1] sm:$0xff]
        %v1090 = vld [vmem:[%s1 + $0x8] sm:$0xf]
        %v1091 = vld [vmem:[%s1 + $0xc] sm:$0xff]
        %v1092 = vld [vmem:[%s1 + $0x14] sm:$0xf]
        %v1093 = vld [vmem:[%s1 + $0x18] sm:$0xff]
        %v1094 = vld [vmem:[%s1 + $0x20] sm:$0xf]
        %v1095 = vld [vmem:[%s1 + $0x24] sm:$0xff]
        %v1096 = vld [vmem:[%s1 + $0x2c] sm:$0xf]
        %v1097 = vld [vmem:[%s1 + $0x30] sm:$0xff]
        %v1098 = vld [vmem:[%s1 + $0x38] sm:$0xf]
        %v1109 = vunpack.c.l.b16 %v1089
        %v1110 = vunpack.c.h.b16 %v1089
        %v1111 = vunpack.c.l.b16 %v1090
        %v1112 = vunpack.c.l.b16 %v1091
        %v1113 = vunpack.c.h.b16 %v1091
        %v1114 = vunpack.c.l.b16 %v1092
        %v1115 = vunpack.c.l.b16 %v1093
        %v1116 = vunpack.c.h.b16 %v1093
        %v1117 = vunpack.c.l.b16 %v1094
        %v1118 = vunpack.c.l.b16 %v1095
        %v1119 = vunpack.c.h.b16 %v1095
        %v1120 = vunpack.c.l.b16 %v1096
        %v1121 = vunpack.c.l.b16 %v1097
        %v1122 = vunpack.c.h.b16 %v1097
        %v1123 = vunpack.c.l.b16 %v1098
        %v1124 = vpack.c.b16 %v1112, %v1109
        %v1125 = vpack.c.b16 %v1113, %v1110
        %v1126 = vpack.c.b16 %v1114, %v1111
        %v1127 = vpack.c.b16 %v1118, %v1115
        %v1128 = vpack.c.b16 %v1119, %v1116
        %v1129 = vpack.c.b16 %v1120, %v1117
        %v1130 = vpack.c.b16 %v1121, %v1121
        %v1131 = vpack.c.b16 %v1122, %v1122
        %v1132 = vpack.c.b16 %v1123, %v1123
        %vm1139 = vcmask 261120
        %v1141 = vsel %vm1139, %v1126, 0
        %v1144 = vsel %vm1139, %v1129, 0
        %v1147 = vsel %vm1139, %v1132, 0
        %1149 = vmatprep.subr.bf16.mxu0 %v311
        %1150 = vmatpush1.bf16.msra.mxu0 %v310
        %1151 = vmatprep.subr.bf16.mxu0 %v853
        %1152 = vmatpush1.bf16.msra.mxu0 %v849
        %1153 = vmatprep.subr.bf16.mxu0 %v874
        %1154 = vmatpush1.bf16.msra.mxu0 %v870
        %1155 = vmatprep.subr.bf16.mxu0 %v422
        %1156 = vmatpush1.bf16.msra.mxu0 %v421
        %1157 = vmatprep.subr.bf16.mxu0 %v895
        %1158 = vmatpush1.bf16.msra.mxu0 %v891
        %1159 = vmatprep.subr.bf16.mxu0 %v916
        %1160 = vmatpush1.bf16.msra.mxu0 %v912
        %1161 = vmatprep.subr.bf16.mxu0 %v937
        %1162 = vmatpush1.bf16.msra.mxu0 %v933
        %1163 = vmatprep.subr.bf16.mxu0 %v570
        %1164 = vmatpush1.bf16.msra.mxu0 %v569
        %1165 = vmatprep.subr.bf16.mxu0 %v958
        %1166 = vmatpush1.bf16.msra.mxu0 %v954
        %1167 = vmatprep.subr.bf16.mxu0 %v979
        %1168 = vmatpush1.bf16.msra.mxu0 %v975
        %1169 = vmatprep.subr.bf16.mxu0 %v669
        %1170 = vmatpush1.bf16.msra.mxu0 %v668
        %1171 = vmatprep.subr.bf16.mxu0 %v699
        %1172 = vmatpush1.bf16.msra.mxu0 %v698
        %1173 = vmatprep.subr.bf16.mxu0 %v999
        %1174 = vmatpush1.bf16.msra.mxu0 %v995
        %1175 = vmatprep.subr.bf16.mxu0 %v1019
        %1176 = vmatpush1.bf16.msra.mxu0 %v1015
        %1177 = vmatprep.subr.bf16.mxu0 %v776
        %1178 = vmatpush1.bf16.msra.mxu0 %v775
        %1179 = vmatprep.subr.bf16.mxu0 %v1039
        %1180 = vmatpush1.bf16.msra.mxu0 %v1035
        %1181 = vmatprep.mubr.bf16.mxu0 %v1125
        %1182 = vmatmul.mubr.bf16.gmra.mrb[0].mxu0 %v1124
        %v1183 = vpop.f32.mrb[0].mxu0
        %v1184 = vadd.f32 0.0, %v1183
        %v1185 = vpop.f32.mrb[0].mxu0
        %v1186 = vadd.f32 0.0, %v1185
        %v1187 = vpop.f32.mrb[0].mxu0
        %v1188 = vadd.f32 0.0, %v1187
        %v1189 = vpop.f32.mrb[0].mxu0
        %v1190 = vadd.f32 0.0, %v1189
        %1191 = vmatprep.mubr.bf16.mxu0 %v1128
        %1192 = vmatmul.mubr.bf16.gmra.mrb[0].mxu0 %v1127
        %v1193 = vpop.f32.mrb[0].mxu0
        %v1194 = vadd.f32 0.0, %v1193
        %v1195 = vpop.f32.mrb[0].mxu0
        %v1196 = vadd.f32 0.0, %v1195
        %v1197 = vpop.f32.mrb[0].mxu0
        %v1198 = vadd.f32 0.0, %v1197
        %v1199 = vpop.f32.mrb[0].mxu0
        %v1200 = vadd.f32 0.0, %v1199
        %1201 = vmatprep.mubr.bf16.mxu0 %v1131
        %1202 = vmatmul.mubr.bf16.gmra.mrb[0].mxu0 %v1130
        %v1203 = vpop.f32.mrb[0].mxu0
        %v1204 = vadd.f32 0.0, %v1203
        %v1205 = vpop.f32.mrb[0].mxu0
        %v1206 = vadd.f32 0.0, %v1205
        %v1207 = vpop.f32.mrb[0].mxu0
        %v1208 = vpop.f32.mrb[0].mxu0
        %1209 = vdwg.mxu0
        %1210 = vmatprep.subr.bf16.mxu0 %v1059
        %1211 = vmatpush1.bf16.msra.mxu0 %v1055
        %1212 = vmatprep.subr.bf16.mxu0 %v1078
        %1213 = vmatpush1.bf16.msra.mxu0 %v1075
        %1214 = vmatprep.subr.bf16.mxu0 0
        %1215 = vmatpush1.bf16.msra.mxu0 0
        %1216 = vmatprep.subr.bf16.mxu0 0
        %1217 = vmatpush1.bf16.msra.mxu0 0
        %1218 = vmatprep.subr.bf16.mxu0 0
        %1219 = vmatpush1.bf16.msra.mxu0 0
        %1220 = vmatprep.subr.bf16.mxu0 0
        %1221 = vmatpush1.bf16.msra.mxu0 0
        %1222 = vmatprep.subr.bf16.mxu0 0
        %1223 = vmatpush1.bf16.msra.mxu0 0
        %1224 = vmatprep.subr.bf16.mxu0 0
        %1225 = vmatpush1.bf16.msra.mxu0 0
        %1226 = vmatprep.subr.bf16.mxu0 0
        %1227 = vmatpush1.bf16.msra.mxu0 0
        %1228 = vmatprep.subr.bf16.mxu0 0
        %1229 = vmatpush1.bf16.msra.mxu0 0
        %1230 = vmatprep.subr.bf16.mxu0 0
        %1231 = vmatpush1.bf16.msra.mxu0 0
        %1232 = vmatprep.subr.bf16.mxu0 0
        %1233 = vmatpush1.bf16.msra.mxu0 0
        %1234 = vmatprep.subr.bf16.mxu0 0
        %1235 = vmatpush1.bf16.msra.mxu0 0
        %1236 = vmatprep.subr.bf16.mxu0 0
        %1237 = vmatpush1.bf16.msra.mxu0 0
        %1238 = vmatprep.subr.bf16.mxu0 0
        %1239 = vmatpush1.bf16.msra.mxu0 0
        %1240 = vmatprep.subr.bf16.mxu0 0
        %1241 = vmatpush1.bf16.msra.mxu0 0
        %1242 = vmatprep.mubr.bf16.mxu0 0
        %1243 = vmatmul.mubr.bf16.gmra.mrb[0].mxu0 %v1141
        %v1244 = vpop.f32.mrb[0].mxu0
        %v1245 = vadd.f32 %v1184, %v1244
        %v1246 = vpop.f32.mrb[0].mxu0
        %v1247 = vadd.f32 %v1186, %v1246
        %v1248 = vpop.f32.mrb[0].mxu0
        %v1249 = vadd.f32 %v1188, %v1248
        %v1250 = vpop.f32.mrb[0].mxu0
        %v1251 = vadd.f32 %v1190, %v1250
        %1252 = vmatprep.mubr.bf16.mxu0 0
        %1253 = vmatmul.mubr.bf16.gmra.mrb[0].mxu0 %v1144
        %v1254 = vpop.f32.mrb[0].mxu0
        %v1255 = vadd.f32 %v1194, %v1254
        %v1256 = vpop.f32.mrb[0].mxu0
        %v1257 = vadd.f32 %v1196, %v1256
        %v1258 = vpop.f32.mrb[0].mxu0
        %v1259 = vadd.f32 %v1198, %v1258
        %v1260 = vpop.f32.mrb[0].mxu0
        %v1261 = vadd.f32 %v1200, %v1260
        %1262 = vmatprep.mubr.bf16.mxu0 0
        %1263 = vmatmul.mubr.bf16.gmra.mrb[0].mxu0 %v1147
        %v1264 = vpop.f32.mrb[0].mxu0
        %v1265 = vadd.f32 %v1204, %v1264
        %v1266 = vpop.f32.mrb[0].mxu0
        %v1267 = vadd.f32 %v1206, %v1266
        %v1268 = vpop.f32.mrb[0].mxu0
        %v1269 = vpop.f32.mrb[0].mxu0
        %1270 = vdwg.mxu0
        %1271 = vmatprep.subr.bf16.mxu0 %v313
        %1272 = vmatpush1.bf16.msra.mxu0 %v312
        %1273 = vmatprep.subr.bf16.mxu0 %v861
        %1274 = vmatpush1.bf16.msra.mxu0 %v857
        %1275 = vmatprep.subr.bf16.mxu0 %v882
        %1276 = vmatpush1.bf16.msra.mxu0 %v878
        %1277 = vmatprep.subr.bf16.mxu0 %v424
        %1278 = vmatpush1.bf16.msra.mxu0 %v423
        %1279 = vmatprep.subr.bf16.mxu0 %v903
        %1280 = vmatpush1.bf16.msra.mxu0 %v899
        %1281 = vmatprep.subr.bf16.mxu0 %v924
        %1282 = vmatpush1.bf16.msra.mxu0 %v920
        %1283 = vmatprep.subr.bf16.mxu0 %v945
        %1284 = vmatpush1.bf16.msra.mxu0 %v941
        %1285 = vmatprep.subr.bf16.mxu0 %v572
        %1286 = vmatpush1.bf16.msra.mxu0 %v571
        %1287 = vmatprep.subr.bf16.mxu0 %v966
        %1288 = vmatpush1.bf16.msra.mxu0 %v962
        %1289 = vmatprep.subr.bf16.mxu0 %v987
        %1290 = vmatpush1.bf16.msra.mxu0 %v983
        %1291 = vmatprep.subr.bf16.mxu0 %v671
        %1292 = vmatpush1.bf16.msra.mxu0 %v670
        %1293 = vmatprep.subr.bf16.mxu0 %v701
        %1294 = vmatpush1.bf16.msra.mxu0 %v700
        %1295 = vmatprep.subr.bf16.mxu0 %v1007
        %1296 = vmatpush1.bf16.msra.mxu0 %v1003
        %1297 = vmatprep.subr.bf16.mxu0 %v1027
        %1298 = vmatpush1.bf16.msra.mxu0 %v1023
        %1299 = vmatprep.subr.bf16.mxu0 %v778
        %1300 = vmatpush1.bf16.msra.mxu0 %v777
        %1301 = vmatprep.subr.bf16.mxu0 %v1047
        %1302 = vmatpush1.bf16.msra.mxu0 %v1043
        %1303 = vmatprep.mubr.bf16.mxu0 %v1125
        %1304 = vmatmul.mubr.bf16.gmra.mrb[0].mxu0 %v1124
        %v1305 = vpop.f32.mrb[0].mxu0
        %v1306 = vadd.f32 0.0, %v1305
        %v1307 = vpop.f32.mrb[0].mxu0
        %v1308 = vadd.f32 0.0, %v1307
        %v1309 = vpop.f32.mrb[0].mxu0
        %v1310 = vadd.f32 0.0, %v1309
        %v1311 = vpop.f32.mrb[0].mxu0
        %v1312 = vadd.f32 0.0, %v1311
        %1313 = vmatprep.mubr.bf16.mxu0 %v1128
        %1314 = vmatmul.mubr.bf16.gmra.mrb[0].mxu0 %v1127
        %v1315 = vpop.f32.mrb[0].mxu0
        %v1316 = vadd.f32 0.0, %v1315
        %v1317 = vpop.f32.mrb[0].mxu0
        %v1318 = vadd.f32 0.0, %v1317
        %v1319 = vpop.f32.mrb[0].mxu0
        %v1320 = vadd.f32 0.0, %v1319
        %v1321 = vpop.f32.mrb[0].mxu0
        %v1322 = vadd.f32 0.0, %v1321
        %1323 = vmatprep.mubr.bf16.mxu0 %v1131
        %1324 = vmatmul.mubr.bf16.gmra.mrb[0].mxu0 %v1130
        %v1325 = vpop.f32.mrb[0].mxu0
        %v1326 = vadd.f32 0.0, %v1325
        %v1327 = vpop.f32.mrb[0].mxu0
        %v1328 = vadd.f32 0.0, %v1327
        %v1329 = vpop.f32.mrb[0].mxu0
        %v1330 = vpop.f32.mrb[0].mxu0
        %1331 = vdwg.mxu0
        %1332 = vmatprep.subr.bf16.mxu0 %v1067
        %1333 = vmatpush1.bf16.msra.mxu0 %v1063
        %1334 = vmatprep.subr.bf16.mxu0 %v1084
        %1335 = vmatpush1.bf16.msra.mxu0 %v1081
        %1336 = vmatprep.subr.bf16.mxu0 0
        %1337 = vmatpush1.bf16.msra.mxu0 0
        %1338 = vmatprep.subr.bf16.mxu0 0
        %1339 = vmatpush1.bf16.msra.mxu0 0
        %1340 = vmatprep.subr.bf16.mxu0 0
        %1341 = vmatpush1.bf16.msra.mxu0 0
        %1342 = vmatprep.subr.bf16.mxu0 0
        %1343 = vmatpush1.bf16.msra.mxu0 0
        %1344 = vmatprep.subr.bf16.mxu0 0
        %1345 = vmatpush1.bf16.msra.mxu0 0
        %1346 = vmatprep.subr.bf16.mxu0 0
        %1347 = vmatpush1.bf16.msra.mxu0 0
        %1348 = vmatprep.subr.bf16.mxu0 0
        %1349 = vmatpush1.bf16.msra.mxu0 0
        %1350 = vmatprep.subr.bf16.mxu0 0
        %1351 = vmatpush1.bf16.msra.mxu0 0
        %1352 = vmatprep.subr.bf16.mxu0 0
        %1353 = vmatpush1.bf16.msra.mxu0 0
        %1354 = vmatprep.subr.bf16.mxu0 0
        %1355 = vmatpush1.bf16.msra.mxu0 0
        %1356 = vmatprep.subr.bf16.mxu0 0
        %1357 = vmatpush1.bf16.msra.mxu0 0
        %1358 = vmatprep.subr.bf16.mxu0 0
        %1359 = vmatpush1.bf16.msra.mxu0 0
        %1360 = vmatprep.subr.bf16.mxu0 0
        %1361 = vmatpush1.bf16.msra.mxu0 0
        %1362 = vmatprep.subr.bf16.mxu0 0
        %1363 = vmatpush1.bf16.msra.mxu0 0
        %1364 = vmatprep.mubr.bf16.mxu0 0
        %1365 = vmatmul.mubr.bf16.gmra.mrb[0].mxu0 %v1141
        %v1366 = vpop.f32.mrb[0].mxu0
        %v1367 = vadd.f32 %v1306, %v1366
        %v1368 = vpop.f32.mrb[0].mxu0
        %v1369 = vadd.f32 %v1308, %v1368
        %v1370 = vpop.f32.mrb[0].mxu0
        %v1371 = vadd.f32 %v1310, %v1370
        %v1372 = vpop.f32.mrb[0].mxu0
        %v1373 = vadd.f32 %v1312, %v1372
        %1374 = vmatprep.mubr.bf16.mxu0 0
        %1375 = vmatmul.mubr.bf16.gmra.mrb[0].mxu0 %v1144
        %v1376 = vpop.f32.mrb[0].mxu0
        %v1377 = vadd.f32 %v1316, %v1376
        %v1378 = vpop.f32.mrb[0].mxu0
        %v1379 = vadd.f32 %v1318, %v1378
        %v1380 = vpop.f32.mrb[0].mxu0
        %v1381 = vadd.f32 %v1320, %v1380
        %v1382 = vpop.f32.mrb[0].mxu0
        %v1383 = vadd.f32 %v1322, %v1382
        %1384 = vmatprep.mubr.bf16.mxu0 0
        %1385 = vmatmul.mubr.bf16.gmra.mrb[0].mxu0 %v1147
        %v1386 = vpop.f32.mrb[0].mxu0
        %v1387 = vadd.f32 %v1326, %v1386
        %v1388 = vpop.f32.mrb[0].mxu0
        %v1389 = vadd.f32 %v1328, %v1388
        %v1390 = vpop.f32.mrb[0].mxu0
        %v1391 = vpop.f32.mrb[0].mxu0
        %1392 = vdwg.mxu0
        %1393 = vmatprep.subr.bf16.mxu0 0
        %1394 = vmatpush1.bf16.msra.mxu0 %v314
        %1395 = vmatprep.subr.bf16.mxu0 0
        %1396 = vmatpush1.bf16.msra.mxu0 %v865
        %1397 = vmatprep.subr.bf16.mxu0 0
        %1398 = vmatpush1.bf16.msra.mxu0 %v886
        %1399 = vmatprep.subr.bf16.mxu0 0
        %1400 = vmatpush1.bf16.msra.mxu0 %v405
        %1401 = vmatprep.subr.bf16.mxu0 0
        %1402 = vmatpush1.bf16.msra.mxu0 %v907
        %1403 = vmatprep.subr.bf16.mxu0 0
        %1404 = vmatpush1.bf16.msra.mxu0 %v928
        %1405 = vmatprep.subr.bf16.mxu0 0
        %1406 = vmatpush1.bf16.msra.mxu0 %v949
        %1407 = vmatprep.subr.bf16.mxu0 0
        %1408 = vmatpush1.bf16.msra.mxu0 %v553
        %1409 = vmatprep.subr.bf16.mxu0 0
        %1410 = vmatpush1.bf16.msra.mxu0 %v970
        %1411 = vmatprep.subr.bf16.mxu0 0
        %1412 = vmatpush1.bf16.msra.mxu0 %v991
        %1413 = vmatprep.subr.bf16.mxu0 0
        %1414 = vmatpush1.bf16.msra.mxu0 %v662
        %1415 = vmatprep.subr.bf16.mxu0 0
        %1416 = vmatpush1.bf16.msra.mxu0 %v686
        %1417 = vmatprep.subr.bf16.mxu0 0
        %1418 = vmatpush1.bf16.msra.mxu0 %v1011
        %1419 = vmatprep.subr.bf16.mxu0 0
        %1420 = vmatpush1.bf16.msra.mxu0 %v1031
        %1421 = vmatprep.subr.bf16.mxu0 0
        %1422 = vmatpush1.bf16.msra.mxu0 %v759
        %1423 = vmatprep.subr.bf16.mxu0 0
        %1424 = vmatpush1.bf16.msra.mxu0 %v1051
        %1425 = vmatprep.mubr.bf16.mxu0 %v1125
        %1426 = vmatmul.mubr.bf16.gmra.mrb[0].mxu0 %v1124
        %v1427 = vpop.f32.mrb[0].mxu0
        %v1428 = vadd.f32 0.0, %v1427
        %v1429 = vpop.f32.mrb[0].mxu0
        %v1430 = vpop.f32.mrb[0].mxu0
        %v1431 = vadd.f32 0.0, %v1430
        %v1432 = vpop.f32.mrb[0].mxu0
        %1433 = vmatprep.mubr.bf16.mxu0 %v1128
        %1434 = vmatmul.mubr.bf16.gmra.mrb[0].mxu0 %v1127
        %v1435 = vpop.f32.mrb[0].mxu0
        %v1436 = vadd.f32 0.0, %v1435
        %v1437 = vpop.f32.mrb[0].mxu0
        %v1438 = vpop.f32.mrb[0].mxu0
        %v1439 = vadd.f32 0.0, %v1438
        %v1440 = vpop.f32.mrb[0].mxu0
        %1441 = vmatprep.mubr.bf16.mxu0 %v1131
        %1442 = vmatmul.mubr.bf16.gmra.mrb[0].mxu0 %v1130
        %v1443 = vpop.f32.mrb[0].mxu0
        %v1444 = vadd.f32 0.0, %v1443
        %v1445 = vpop.f32.mrb[0].mxu0
        %v1446 = vpop.f32.mrb[0].mxu0
        %v1447 = vpop.f32.mrb[0].mxu0
        %1448 = vdwg.mxu0
        %1449 = vmatprep.subr.bf16.mxu0 0
        %1450 = vmatpush1.bf16.msra.mxu0 %v1071
        %1451 = vmatprep.subr.bf16.mxu0 0
        %1452 = vmatpush1.bf16.msra.mxu0 %v1087
        %1453 = vmatprep.subr.bf16.mxu0 0
        %1454 = vmatpush1.bf16.msra.mxu0 0
        %1455 = vmatprep.subr.bf16.mxu0 0
        %1456 = vmatpush1.bf16.msra.mxu0 0
        %1457 = vmatprep.subr.bf16.mxu0 0
        %1458 = vmatpush1.bf16.msra.mxu0 0
        %1459 = vmatprep.subr.bf16.mxu0 0
        %1460 = vmatpush1.bf16.msra.mxu0 0
        %1461 = vmatprep.subr.bf16.mxu0 0
        %1462 = vmatpush1.bf16.msra.mxu0 0
        %1463 = vmatprep.subr.bf16.mxu0 0
        %1464 = vmatpush1.bf16.msra.mxu0 0
        %1465 = vmatprep.subr.bf16.mxu0 0
        %1466 = vmatpush1.bf16.msra.mxu0 0
        %1467 = vmatprep.subr.bf16.mxu0 0
        %1468 = vmatpush1.bf16.msra.mxu0 0
        %1469 = vmatprep.subr.bf16.mxu0 0
        %1470 = vmatpush1.bf16.msra.mxu0 0
        %1471 = vmatprep.subr.bf16.mxu0 0
        %1472 = vmatpush1.bf16.msra.mxu0 0
        %1473 = vmatprep.subr.bf16.mxu0 0
        %1474 = vmatpush1.bf16.msra.mxu0 0
        %1475 = vmatprep.subr.bf16.mxu0 0
        %1476 = vmatpush1.bf16.msra.mxu0 0
        %1477 = vmatprep.subr.bf16.mxu0 0
        %1478 = vmatpush1.bf16.msra.mxu0 0
        %1479 = vmatprep.subr.bf16.mxu0 0
        %1480 = vmatpush1.bf16.msra.mxu0 0
        %1481 = vmatprep.mubr.bf16.mxu0 0
        %1482 = vmatmul.mubr.bf16.gmra.mrb[0].mxu0 %v1141
        %v1483 = vpop.f32.mrb[0].mxu0
        %v1484 = vadd.f32 %v1428, %v1483
        %v1485 = vpop.f32.mrb[0].mxu0
        %v1486 = vpop.f32.mrb[0].mxu0
        %v1487 = vadd.f32 %v1431, %v1486
        %v1488 = vpop.f32.mrb[0].mxu0
        %1489 = vmatprep.mubr.bf16.mxu0 0
        %1490 = vmatmul.mubr.bf16.gmra.mrb[0].mxu0 %v1144
        %v1491 = vpop.f32.mrb[0].mxu0
        %v1492 = vadd.f32 %v1436, %v1491
        %v1493 = vpop.f32.mrb[0].mxu0
        %v1494 = vpop.f32.mrb[0].mxu0
        %v1495 = vadd.f32 %v1439, %v1494
        %v1496 = vpop.f32.mrb[0].mxu0
        %1497 = vmatprep.mubr.bf16.mxu0 0
        %1498 = vmatmul.mubr.bf16.gmra.mrb[0].mxu0 %v1147
        %v1499 = vpop.f32.mrb[0].mxu0
        %v1500 = vadd.f32 %v1444, %v1499
        %v1501 = vpop.f32.mrb[0].mxu0
        %v1502 = vpop.f32.mrb[0].mxu0
        %v1503 = vpop.f32.mrb[0].mxu0
        %1504 = vdwg.mxu0
        %v1505 = vld [vmem:[%s2] sm:$0xff]
        %v1506 = vld [vmem:[%s2 + $0x8] sm:$0xff]
        %v1507 = vld [vmem:[%s2 + $0x10] sm:$0xff]
        %v1508 = vld [vmem:[%s2 + $0x18] sm:$0xff]
        %v1509 = vld [vmem:[%s2 + $0x20] sm:$0xff]
        %1511 = vset.pattern.permute.xlu0 0
        %1512 = vperm.xlu0 %1511, %v1505
        %v1513 = vpop.permute.xlu0 %1512
        %1516 = vset.pattern.permute.xlu0 0
        %1517 = vperm.xlu0 %1516, %v1506
        %v1518 = vpop.permute.xlu0 %1517
        %1521 = vset.pattern.permute.xlu0 0
        %1522 = vperm.xlu0 %1521, %v1507
        %v1523 = vpop.permute.xlu0 %1522
        %1526 = vset.pattern.permute.xlu0 0
        %1527 = vperm.xlu0 %1526, %v1508
        %v1528 = vpop.permute.xlu0 %1527
        %1531 = vset.pattern.permute.xlu0 0
        %1532 = vperm.xlu0 %1531, %v1509
        %v1533 = vpop.permute.xlu0 %1532
        %v1535 = vmul.f32 %v1245, %v1513
        %v1536 = vmul.f32 %v1247, %v1513
        %v1537 = vmul.f32 %v1367, %v1513
        %v1538 = vmul.f32 %v1369, %v1513
        %v1539 = vmul.f32 %v1484, %v1513
        %v1540 = vmul.f32 %v1249, %v1518
        %v1541 = vmul.f32 %v1251, %v1518
        %v1542 = vmul.f32 %v1371, %v1518
        %v1543 = vmul.f32 %v1373, %v1518
        %v1544 = vmul.f32 %v1487, %v1518
        %v1545 = vmul.f32 %v1255, %v1523
        %v1546 = vmul.f32 %v1257, %v1523
        %v1547 = vmul.f32 %v1377, %v1523
        %v1548 = vmul.f32 %v1379, %v1523
        %v1549 = vmul.f32 %v1492, %v1523
        %v1550 = vmul.f32 %v1259, %v1528
        %v1551 = vmul.f32 %v1261, %v1528
        %v1552 = vmul.f32 %v1381, %v1528
        %v1553 = vmul.f32 %v1383, %v1528
        %v1554 = vmul.f32 %v1495, %v1528
        %v1555 = vmul.f32 %v1265, %v1533
        %v1556 = vmul.f32 %v1267, %v1533
        %v1557 = vmul.f32 %v1387, %v1533
        %v1558 = vmul.f32 %v1389, %v1533
        %v1559 = vmul.f32 %v1500, %v1533
        %v1560 = vld [vmem:[%s3] sm:$0xff]
        %v1561 = vld [vmem:[%s3 + $0x8] sm:$0xff]
        %v1562 = vld [vmem:[%s3 + $0x10] sm:$0xff]
        %v1563 = vld [vmem:[%s3 + $0x18] sm:$0xff]
        %v1564 = vld [vmem:[%s3 + $0x20] sm:$0xff]
        %1566 = vset.pattern.permute.xlu0 0
        %1567 = vperm.xlu0 %1566, %v1560
        %v1568 = vpop.permute.xlu0 %1567
        %1571 = vset.pattern.permute.xlu0 0
        %1572 = vperm.xlu0 %1571, %v1561
        %v1573 = vpop.permute.xlu0 %1572
        %1576 = vset.pattern.permute.xlu0 0
        %1577 = vperm.xlu0 %1576, %v1562
        %v1578 = vpop.permute.xlu0 %1577
        %1581 = vset.pattern.permute.xlu0 0
        %1582 = vperm.xlu0 %1581, %v1563
        %v1583 = vpop.permute.xlu0 %1582
        %1586 = vset.pattern.permute.xlu0 0
        %1587 = vperm.xlu0 %1586, %v1564
        %v1588 = vpop.permute.xlu0 %1587
        %v1590 = vadd.f32 %v1535, %v1568
        %v1591 = vadd.f32 %v1536, %v1568
        %v1592 = vadd.f32 %v1537, %v1568
        %v1593 = vadd.f32 %v1538, %v1568
        %v1594 = vadd.f32 %v1539, %v1568
        %v1595 = vadd.f32 %v1540, %v1573
        %v1596 = vadd.f32 %v1541, %v1573
        %v1597 = vadd.f32 %v1542, %v1573
        %v1598 = vadd.f32 %v1543, %v1573
        %v1599 = vadd.f32 %v1544, %v1573
        %v1600 = vadd.f32 %v1545, %v1578
        %v1601 = vadd.f32 %v1546, %v1578
        %v1602 = vadd.f32 %v1547, %v1578
        %v1603 = vadd.f32 %v1548, %v1578
        %v1604 = vadd.f32 %v1549, %v1578
        %v1605 = vadd.f32 %v1550, %v1583
        %v1606 = vadd.f32 %v1551, %v1583
        %v1607 = vadd.f32 %v1552, %v1583
        %v1608 = vadd.f32 %v1553, %v1583
        %v1609 = vadd.f32 %v1554, %v1583
        %v1610 = vadd.f32 %v1555, %v1588
        %v1611 = vadd.f32 %v1556, %v1588
        %v1612 = vadd.f32 %v1557, %v1588
        %v1613 = vadd.f32 %v1558, %v1588
        %v1614 = vadd.f32 %v1559, %v1588
        %v1615 = vmul.f32 %v1590, %v1590
        %v1616 = vmul.f32 %v1591, %v1591
        %v1617 = vmul.f32 %v1592, %v1592
        %v1618 = vmul.f32 %v1593, %v1593
        %v1619 = vmul.f32 %v1594, %v1594
        %v1620 = vmul.f32 %v1595, %v1595
        %v1621 = vmul.f32 %v1596, %v1596
        %v1622 = vmul.f32 %v1597, %v1597
        %v1623 = vmul.f32 %v1598, %v1598
        %v1624 = vmul.f32 %v1599, %v1599
        %v1625 = vmul.f32 %v1600, %v1600
        %v1626 = vmul.f32 %v1601, %v1601
        %v1627 = vmul.f32 %v1602, %v1602
        %v1628 = vmul.f32 %v1603, %v1603
        %v1629 = vmul.f32 %v1604, %v1604
        %v1630 = vmul.f32 %v1605, %v1605
        %v1631 = vmul.f32 %v1606, %v1606
        %v1632 = vmul.f32 %v1607, %v1607
        %v1633 = vmul.f32 %v1608, %v1608
        %v1634 = vmul.f32 %v1609, %v1609
        %v1635 = vmul.f32 %v1610, %v1610
        %v1636 = vmul.f32 %v1611, %v1611
        %v1637 = vmul.f32 %v1612, %v1612
        %v1638 = vmul.f32 %v1613, %v1613
        %v1639 = vmul.f32 %v1614, %v1614
        %v1640 = vpack.c.bf16 %v1620, %v1615
        %v1641 = vpack.c.bf16 %v1621, %v1616
        %v1642 = vpack.c.bf16 %v1622, %v1617
        %v1643 = vpack.c.bf16 %v1623, %v1618
        %v1644 = vpack.c.bf16 %v1624, %v1619
        %v1645 = vpack.c.bf16 %v1630, %v1625
        %v1646 = vpack.c.bf16 %v1631, %v1626
        %v1647 = vpack.c.bf16 %v1632, %v1627
        %v1648 = vpack.c.bf16 %v1633, %v1628
        %v1649 = vpack.c.bf16 %v1634, %v1629
        %v1650 = vpack.c.bf16 %v1635, %v1635
        %v1651 = vpack.c.bf16 %v1636, %v1636
        %v1652 = vpack.c.bf16 %v1637, %v1637
        %v1653 = vpack.c.bf16 %v1638, %v1638
        %v1654 = vpack.c.bf16 %v1639, %v1639
        %v1655 = vld [vmem:[%s4] sm:$0xf]
        %v1656 = vld [vmem:[%s4 + $0x4] sm:$0xf]
        %v1657 = vld [vmem:[%s4 + $0x8] sm:$0xf]
        %v1658 = vld [vmem:[%s4 + $0xc] sm:$0xf]
        %v1659 = vld [vmem:[%s4 + $0x10] sm:$0xf]
        %v1660 = vld [vmem:[%s4 + $0x14] sm:$0xf]
        %v1661 = vld [vmem:[%s4 + $0x18] sm:$0xf]
        %v1662 = vld [vmem:[%s4 + $0x1c] sm:$0xf]
        %v1663 = vld [vmem:[%s4 + $0x20] sm:$0xf]
        %v1664 = vld [vmem:[%s4 + $0x24] sm:$0xf]
        %v1665 = vld [vmem:[%s4 + $0x28] sm:$0xf]
        %v1666 = vld [vmem:[%s4 + $0x2c] sm:$0xf]
        %v1667 = vld [vmem:[%s4 + $0x30] sm:$0xf]
        %v1668 = vld [vmem:[%s4 + $0x34] sm:$0xf]
        %v1669 = vld [vmem:[%s4 + $0x38] sm:$0xf]
        %v1670 = vld [vmem:[%s4 + $0x3c] sm:$0xf]
        %v1671 = vld [vmem:[%s4 + $0x40] sm:$0xf]
        %v1672 = vld [vmem:[%s4 + $0x44] sm:$0xf]
        %v1673 = vld [vmem:[%s4 + $0x48] sm:$0xf]
        %v1674 = vld [vmem:[%s4 + $0x4c] sm:$0xf]
        %v1675 = vld [vmem:[%s4 + $0x50] sm:$0xf]
        %v1676 = vld [vmem:[%s4 + $0x54] sm:$0xf]
        %v1677 = vld [vmem:[%s4 + $0x58] sm:$0xf]
        %v1678 = vld [vmem:[%s4 + $0x5c] sm:$0xf]
        %v1679 = vld [vmem:[%s4 + $0x60] sm:$0xf]
        %v1680 = vld [vmem:[%s4 + $0x64] sm:$0xf]
        %v1681 = vld [vmem:[%s4 + $0x68] sm:$0xf]
        %v1682 = vld [vmem:[%s4 + $0x6c] sm:$0xf]
        %v1683 = vld [vmem:[%s4 + $0x70] sm:$0xf]
        %v1684 = vld [vmem:[%s4 + $0x74] sm:$0xf]
        %v1685 = vld [vmem:[%s4 + $0x78] sm:$0xf]
        %v1686 = vld [vmem:[%s4 + $0x7c] sm:$0xf]
        %v1687 = vld [vmem:[%s4 + $0x80] sm:$0xf]
        %v1688 = vld [vmem:[%s4 + $0x84] sm:$0xf]
        %v1689 = vld [vmem:[%s4 + $0x88] sm:$0xf]
        %v1690 = vld [vmem:[%s4 + $0x8c] sm:$0xf]
        %v1691 = vld [vmem:[%s4 + $0x90] sm:$0xf]
        %v1692 = vld [vmem:[%s4 + $0x94] sm:$0xf]
        %v1693 = vld [vmem:[%s4 + $0x98] sm:$0xf]
        %v1694 = vld [vmem:[%s4 + $0x9c] sm:$0xf]
        %v1695 = vld [vmem:[%s4 + $0xa0] sm:$0xf]
        %v1696 = vld [vmem:[%s4 + $0xa4] sm:$0xf]
        %v1697 = vld [vmem:[%s4 + $0xa8] sm:$0xf]
        %v1698 = vld [vmem:[%s4 + $0xac] sm:$0xf]
        %v1699 = vld [vmem:[%s4 + $0xb0] sm:$0xf]
        %v1700 = vld [vmem:[%s4 + $0xb4] sm:$0xf]
        %v1701 = vld [vmem:[%s4 + $0xb8] sm:$0xf]
        %v1702 = vld [vmem:[%s4 + $0xbc] sm:$0xf]
        %v1703 = vld [vmem:[%s4 + $0xc0] sm:$0xf]
        %v1704 = vld [vmem:[%s4 + $0xc4] sm:$0xf]
        %v1705 = vld [vmem:[%s4 + $0xc8] sm:$0xf]
        %v1706 = vld [vmem:[%s4 + $0xcc] sm:$0xf]
        %v1707 = vld [vmem:[%s4 + $0xd0] sm:$0xf]
        %v1708 = vld [vmem:[%s4 + $0xd4] sm:$0xf]
        %v1709 = vld [vmem:[%s4 + $0xd8] sm:$0xf]
        %v1710 = vld [vmem:[%s4 + $0xdc] sm:$0xf]
        %v1711 = vld [vmem:[%s4 + $0xe0] sm:$0xf]
        %v1712 = vld [vmem:[%s4 + $0xe4] sm:$0xf]
        %v1713 = vld [vmem:[%s4 + $0xe8] sm:$0xf]
        %v1714 = vld [vmem:[%s4 + $0xec] sm:$0xf]
        %v1715 = vld [vmem:[%s4 + $0xf0] sm:$0xf]
        %v1716 = vld [vmem:[%s4 + $0xf4] sm:$0xf]
        %v1717 = vld [vmem:[%s4 + $0xf8] sm:$0xf]
        %v1718 = vld [vmem:[%s4 + $0xfc] sm:$0xf]
        %v1719 = vld [vmem:[%s4 + $0x100] sm:$0xf]
        %v1720 = vld [vmem:[%s4 + $0x104] sm:$0xf]
        %v1721 = vld [vmem:[%s4 + $0x108] sm:$0xf]
        %v1722 = vld [vmem:[%s4 + $0x10c] sm:$0xf]
        %v1723 = vld [vmem:[%s4 + $0x110] sm:$0x1]
        %v1793 = vunpack.c.l.b16 %v1655
        %v1794 = vunpack.c.l.b16 %v1656
        %v1795 = vunpack.c.l.b16 %v1657
        %v1796 = vunpack.c.l.b16 %v1658
        %v1797 = vunpack.c.l.b16 %v1659
        %v1798 = vunpack.c.l.b16 %v1660
        %v1799 = vunpack.c.l.b16 %v1661
        %v1800 = vunpack.c.l.b16 %v1662
        %v1801 = vunpack.c.l.b16 %v1663
        %v1802 = vunpack.c.l.b16 %v1664
        %v1803 = vunpack.c.l.b16 %v1665
        %v1804 = vunpack.c.l.b16 %v1666
        %v1805 = vunpack.c.l.b16 %v1667
        %v1806 = vunpack.c.l.b16 %v1668
        %v1807 = vunpack.c.l.b16 %v1669
        %v1808 = vunpack.c.l.b16 %v1670
        %v1809 = vunpack.c.l.b16 %v1671
        %v1810 = vunpack.c.l.b16 %v1672
        %v1811 = vunpack.c.l.b16 %v1673
        %v1812 = vunpack.c.l.b16 %v1674
        %v1813 = vunpack.c.l.b16 %v1675
        %v1814 = vunpack.c.l.b16 %v1676
        %v1815 = vunpack.c.l.b16 %v1677
        %v1816 = vunpack.c.l.b16 %v1678
        %v1817 = vunpack.c.l.b16 %v1679
        %v1818 = vunpack.c.l.b16 %v1680
        %v1819 = vunpack.c.l.b16 %v1681
        %v1820 = vunpack.c.l.b16 %v1682
        %v1821 = vunpack.c.l.b16 %v1683
        %v1822 = vunpack.c.l.b16 %v1684
        %v1823 = vunpack.c.l.b16 %v1685
        %v1824 = vunpack.c.l.b16 %v1686
        %v1825 = vunpack.c.l.b16 %v1687
        %v1826 = vunpack.c.l.b16 %v1688
        %v1827 = vunpack.c.l.b16 %v1689
        %v1828 = vunpack.c.l.b16 %v1690
        %v1829 = vunpack.c.l.b16 %v1691
        %v1830 = vunpack.c.l.b16 %v1692
        %v1831 = vunpack.c.l.b16 %v1693
        %v1832 = vunpack.c.l.b16 %v1694
        %v1833 = vunpack.c.l.b16 %v1695
        %v1834 = vunpack.c.l.b16 %v1696
        %v1835 = vunpack.c.l.b16 %v1697
        %v1836 = vunpack.c.l.b16 %v1698
        %v1837 = vunpack.c.l.b16 %v1699
        %v1838 = vunpack.c.l.b16 %v1700
        %v1839 = vunpack.c.l.b16 %v1701
        %v1840 = vunpack.c.l.b16 %v1702
        %v1841 = vunpack.c.l.b16 %v1703
        %v1842 = vunpack.c.l.b16 %v1704
        %v1843 = vunpack.c.l.b16 %v1705
        %v1844 = vunpack.c.l.b16 %v1706
        %v1845 = vunpack.c.l.b16 %v1707
        %v1846 = vunpack.c.l.b16 %v1708
        %v1847 = vunpack.c.l.b16 %v1709
        %v1848 = vunpack.c.l.b16 %v1710
        %v1849 = vunpack.c.l.b16 %v1711
        %v1850 = vunpack.c.l.b16 %v1712
        %v1851 = vunpack.c.l.b16 %v1713
        %v1852 = vunpack.c.l.b16 %v1714
        %v1853 = vunpack.c.l.b16 %v1715
        %v1854 = vunpack.c.l.b16 %v1716
        %v1855 = vunpack.c.l.b16 %v1717
        %v1856 = vunpack.c.l.b16 %v1718
        %v1857 = vunpack.c.l.b16 %v1719
        %v1858 = vunpack.c.l.b16 %v1720
        %v1859 = vunpack.c.l.b16 %v1721
        %v1860 = vunpack.c.l.b16 %v1722
        %v1861 = vunpack.c.l.b16 %v1723
        %v1862 = vpack.c.b16 %v1794, %v1793
        %v1863 = vpack.c.b16 %v1796, %v1795
        %v1864 = vpack.c.b16 %v1798, %v1797
        %v1865 = vpack.c.b16 %v1800, %v1799
        %v1866 = vpack.c.b16 %v1802, %v1801
        %v1867 = vpack.c.b16 %v1804, %v1803
        %v1868 = vpack.c.b16 %v1806, %v1805
        %v1869 = vpack.c.b16 %v1808, %v1807
        %v1870 = vpack.c.b16 %v1810, %v1809
        %v1871 = vpack.c.b16 %v1812, %v1811
        %v1872 = vpack.c.b16 %v1814, %v1813
        %v1873 = vpack.c.b16 %v1816, %v1815
        %v1874 = vpack.c.b16 %v1818, %v1817
        %v1875 = vpack.c.b16 %v1820, %v1819
        %v1876 = vpack.c.b16 %v1822, %v1821
        %v1877 = vpack.c.b16 %v1824, %v1823
        %v1878 = vpack.c.b16 %v1826, %v1825
        %v1879 = vpack.c.b16 %v1828, %v1827
        %v1880 = vpack.c.b16 %v1830, %v1829
        %v1881 = vpack.c.b16 %v1832, %v1831
        %v1882 = vpack.c.b16 %v1834, %v1833
        %v1883 = vpack.c.b16 %v1836, %v1835
        %v1884 = vpack.c.b16 %v1838, %v1837
        %v1885 = vpack.c.b16 %v1840, %v1839
        %v1886 = vpack.c.b16 %v1842, %v1841
        %v1887 = vpack.c.b16 %v1844, %v1843
        %v1888 = vpack.c.b16 %v1846, %v1845
        %v1889 = vpack.c.b16 %v1848, %v1847
        %v1890 = vpack.c.b16 %v1850, %v1849
        %v1891 = vpack.c.b16 %v1852, %v1851
        %v1892 = vpack.c.b16 %v1854, %v1853
        %v1893 = vpack.c.b16 %v1856, %v1855
        %v1894 = vpack.c.b16 %v1858, %v1857
        %v1895 = vpack.c.b16 %v1860, %v1859
        %v1896 = vpack.c.b16 %v1861, %v1861
        %vm1931 = vcmask 277504
        %v1933 = vsel %vm1931, %v1644, 0
        %v1936 = vsel %vm1931, %v1649, 0
        %v1939 = vsel %vm1931, %v1654, 0
        %v1942 = vsel %vm888, %v1896, 0
        %1944 = vmatprep.subr.bf16.mxu0 0
        %1945 = vmatpush1.bf16.msra.mxu0 %v1862
        %1946 = vmatprep.subr.bf16.mxu0 0
        %1947 = vmatpush1.bf16.msra.mxu0 %v1863
        %1948 = vmatprep.subr.bf16.mxu0 0
        %1949 = vmatpush1.bf16.msra.mxu0 %v1864
        %1950 = vmatprep.subr.bf16.mxu0 0
        %1951 = vmatpush1.bf16.msra.mxu0 %v1865
        %1952 = vmatprep.subr.bf16.mxu0 0
        %1953 = vmatpush1.bf16.msra.mxu0 %v1866
        %1954 = vmatprep.subr.bf16.mxu0 0
        %1955 = vmatpush1.bf16.msra.mxu0 %v1867
        %1956 = vmatprep.subr.bf16.mxu0 0
        %1957 = vmatpush1.bf16.msra.mxu0 %v1868
        %1958 = vmatprep.subr.bf16.mxu0 0
        %1959 = vmatpush1.bf16.msra.mxu0 %v1869
        %1960 = vmatprep.subr.bf16.mxu0 0
        %1961 = vmatpush1.bf16.msra.mxu0 %v1870
        %1962 = vmatprep.subr.bf16.mxu0 0
        %1963 = vmatpush1.bf16.msra.mxu0 %v1871
        %1964 = vmatprep.subr.bf16.mxu0 0
        %1965 = vmatpush1.bf16.msra.mxu0 %v1872
        %1966 = vmatprep.subr.bf16.mxu0 0
        %1967 = vmatpush1.bf16.msra.mxu0 %v1873
        %1968 = vmatprep.subr.bf16.mxu0 0
        %1969 = vmatpush1.bf16.msra.mxu0 %v1874
        %1970 = vmatprep.subr.bf16.mxu0 0
        %1971 = vmatpush1.bf16.msra.mxu0 %v1875
        %1972 = vmatprep.subr.bf16.mxu0 0
        %1973 = vmatpush1.bf16.msra.mxu0 %v1876
        %1974 = vmatprep.subr.bf16.mxu0 0
        %1975 = vmatpush1.bf16.msra.mxu0 %v1877
        %1976 = vmatprep.mubr.bf16.mxu0 %v1641
        %1977 = vmatmul.mubr.bf16.gmra.mrb[0].mxu0 %v1640
        %v1978 = vpop.f32.mrb[0].mxu0
        %v1979 = vadd.f32 0.0, %v1978
        %v1980 = vpop.f32.mrb[0].mxu0
        %v1981 = vpop.f32.mrb[0].mxu0
        %v1982 = vadd.f32 0.0, %v1981
        %v1983 = vpop.f32.mrb[0].mxu0
        %1984 = vmatprep.mubr.bf16.mxu0 %v1646
        %1985 = vmatmul.mubr.bf16.gmra.mrb[0].mxu0 %v1645
        %v1986 = vpop.f32.mrb[0].mxu0
        %v1987 = vadd.f32 0.0, %v1986
        %v1988 = vpop.f32.mrb[0].mxu0
        %v1989 = vpop.f32.mrb[0].mxu0
        %v1990 = vadd.f32 0.0, %v1989
        %v1991 = vpop.f32.mrb[0].mxu0
        %1992 = vmatprep.mubr.bf16.mxu0 %v1651
        %1993 = vmatmul.mubr.bf16.gmra.mrb[0].mxu0 %v1650
        %v1994 = vpop.f32.mrb[0].mxu0
        %v1995 = vadd.f32 0.0, %v1994
        %v1996 = vpop.f32.mrb[0].mxu0
        %v1997 = vpop.f32.mrb[0].mxu0
        %v1998 = vpop.f32.mrb[0].mxu0
        %1999 = vdwg.mxu0
        %2000 = vmatprep.subr.bf16.mxu0 0
        %2001 = vmatpush1.bf16.msra.mxu0 %v1878
        %2002 = vmatprep.subr.bf16.mxu0 0
        %2003 = vmatpush1.bf16.msra.mxu0 %v1879
        %2004 = vmatprep.subr.bf16.mxu0 0
        %2005 = vmatpush1.bf16.msra.mxu0 %v1880
        %2006 = vmatprep.subr.bf16.mxu0 0
        %2007 = vmatpush1.bf16.msra.mxu0 %v1881
        %2008 = vmatprep.subr.bf16.mxu0 0
        %2009 = vmatpush1.bf16.msra.mxu0 %v1882
        %2010 = vmatprep.subr.bf16.mxu0 0
        %2011 = vmatpush1.bf16.msra.mxu0 %v1883
        %2012 = vmatprep.subr.bf16.mxu0 0
        %2013 = vmatpush1.bf16.msra.mxu0 %v1884
        %2014 = vmatprep.subr.bf16.mxu0 0
        %2015 = vmatpush1.bf16.msra.mxu0 %v1885
        %2016 = vmatprep.subr.bf16.mxu0 0
        %2017 = vmatpush1.bf16.msra.mxu0 %v1886
        %2018 = vmatprep.subr.bf16.mxu0 0
        %2019 = vmatpush1.bf16.msra.mxu0 %v1887
        %2020 = vmatprep.subr.bf16.mxu0 0
        %2021 = vmatpush1.bf16.msra.mxu0 %v1888
        %2022 = vmatprep.subr.bf16.mxu0 0
        %2023 = vmatpush1.bf16.msra.mxu0 %v1889
        %2024 = vmatprep.subr.bf16.mxu0 0
        %2025 = vmatpush1.bf16.msra.mxu0 %v1890
        %2026 = vmatprep.subr.bf16.mxu0 0
        %2027 = vmatpush1.bf16.msra.mxu0 %v1891
        %2028 = vmatprep.subr.bf16.mxu0 0
        %2029 = vmatpush1.bf16.msra.mxu0 %v1892
        %2030 = vmatprep.subr.bf16.mxu0 0
        %2031 = vmatpush1.bf16.msra.mxu0 %v1893
        %2032 = vmatprep.mubr.bf16.mxu0 %v1643
        %2033 = vmatmul.mubr.bf16.gmra.mrb[0].mxu0 %v1642
        %v2034 = vpop.f32.mrb[0].mxu0
        %v2035 = vadd.f32 %v1979, %v2034
        %v2036 = vpop.f32.mrb[0].mxu0
        %v2037 = vpop.f32.mrb[0].mxu0
        %v2038 = vadd.f32 %v1982, %v2037
        %v2039 = vpop.f32.mrb[0].mxu0
        %2040 = vmatprep.mubr.bf16.mxu0 %v1648
        %2041 = vmatmul.mubr.bf16.gmra.mrb[0].mxu0 %v1647
        %v2042 = vpop.f32.mrb[0].mxu0
        %v2043 = vadd.f32 %v1987, %v2042
        %v2044 = vpop.f32.mrb[0].mxu0
        %v2045 = vpop.f32.mrb[0].mxu0
        %v2046 = vadd.f32 %v1990, %v2045
        %v2047 = vpop.f32.mrb[0].mxu0
        %2048 = vmatprep.mubr.bf16.mxu0 %v1653
        %2049 = vmatmul.mubr.bf16.gmra.mrb[0].mxu0 %v1652
        %v2050 = vpop.f32.mrb[0].mxu0
        %v2051 = vadd.f32 %v1995, %v2050
        %v2052 = vpop.f32.mrb[0].mxu0
        %v2053 = vpop.f32.mrb[0].mxu0
        %v2054 = vpop.f32.mrb[0].mxu0
        %2055 = vdwg.mxu0
        %2056 = vmatprep.subr.bf16.mxu0 0
        %2057 = vmatpush1.bf16.msra.mxu0 %v1894
        %2058 = vmatprep.subr.bf16.mxu0 0
        %2059 = vmatpush1.bf16.msra.mxu0 %v1895
        %2060 = vmatprep.subr.bf16.mxu0 0
        %2061 = vmatpush1.bf16.msra.mxu0 %v1942
        %2062 = vmatprep.subr.bf16.mxu0 0
        %2063 = vmatpush1.bf16.msra.mxu0 0
        %2064 = vmatprep.subr.bf16.mxu0 0
        %2065 = vmatpush1.bf16.msra.mxu0 0
        %2066 = vmatprep.subr.bf16.mxu0 0
        %2067 = vmatpush1.bf16.msra.mxu0 0
        %2068 = vmatprep.subr.bf16.mxu0 0
        %2069 = vmatpush1.bf16.msra.mxu0 0
        %2070 = vmatprep.subr.bf16.mxu0 0
        %2071 = vmatpush1.bf16.msra.mxu0 0
        %2072 = vmatprep.subr.bf16.mxu0 0
        %2073 = vmatpush1.bf16.msra.mxu0 0
        %2074 = vmatprep.subr.bf16.mxu0 0
        %2075 = vmatpush1.bf16.msra.mxu0 0
        %2076 = vmatprep.subr.bf16.mxu0 0
        %2077 = vmatpush1.bf16.msra.mxu0 0
        %2078 = vmatprep.subr.bf16.mxu0 0
        %2079 = vmatpush1.bf16.msra.mxu0 0
        %2080 = vmatprep.subr.bf16.mxu0 0
        %2081 = vmatpush1.bf16.msra.mxu0 0
        %2082 = vmatprep.subr.bf16.mxu0 0
        %2083 = vmatpush1.bf16.msra.mxu0 0
        %2084 = vmatprep.subr.bf16.mxu0 0
        %2085 = vmatpush1.bf16.msra.mxu0 0
        %2086 = vmatprep.subr.bf16.mxu0 0
        %2087 = vmatpush1.bf16.msra.mxu0 0
        %2088 = vmatprep.mubr.bf16.mxu0 0
        %2089 = vmatmul.mubr.bf16.gmra.mrb[0].mxu0 %v1933
        %v2090 = vpop.f32.mrb[0].mxu0
        %v2091 = vadd.f32 %v2035, %v2090
        %v2092 = vpop.f32.mrb[0].mxu0
        %v2093 = vpop.f32.mrb[0].mxu0
        %v2094 = vadd.f32 %v2038, %v2093
        %v2095 = vpop.f32.mrb[0].mxu0
        %2096 = vmatprep.mubr.bf16.mxu0 0
        %2097 = vmatmul.mubr.bf16.gmra.mrb[0].mxu0 %v1936
        %v2098 = vpop.f32.mrb[0].mxu0
        %v2099 = vadd.f32 %v2043, %v2098
        %v2100 = vpop.f32.mrb[0].mxu0
        %v2101 = vpop.f32.mrb[0].mxu0
        %v2102 = vadd.f32 %v2046, %v2101
        %v2103 = vpop.f32.mrb[0].mxu0
        %2104 = vmatprep.mubr.bf16.mxu0 0
        %2105 = vmatmul.mubr.bf16.gmra.mrb[0].mxu0 %v1939
        %v2106 = vpop.f32.mrb[0].mxu0
        %v2107 = vadd.f32 %v2051, %v2106
        %v2108 = vpop.f32.mrb[0].mxu0
        %v2109 = vpop.f32.mrb[0].mxu0
        %v2110 = vpop.f32.mrb[0].mxu0
        %2111 = vdwg.mxu0
        %v2112 = vmul.f32 %v2091, 0.028571429
        %v2113 = vmul.f32 %v2094, 0.028571429
        %v2114 = vmul.f32 %v2099, 0.028571429
        %v2115 = vmul.f32 %v2102, 0.028571429
        %v2116 = vmul.f32 %v2107, 0.028571429
        %v2117 = vlog2.pop %v2112
        %v2118 = vmul.f32 %v2117, 0.6931472
        %v2119 = vlog2.pop %v2113
        %v2120 = vmul.f32 %v2119, 0.6931472
        %v2121 = vlog2.pop %v2114
        %v2122 = vmul.f32 %v2121, 0.6931472
        %v2123 = vlog2.pop %v2115
        %v2124 = vmul.f32 %v2123, 0.6931472
        %v2125 = vlog2.pop %v2116
        %v2126 = vmul.f32 %v2125, 0.6931472
        %v2127 = vld [vmem:[%s5] sm:$0xff]
        %v2128 = vld [vmem:[%s5 + $0x8] sm:$0xff]
        %v2129 = vld [vmem:[%s5 + $0x10] sm:$0xff]
        %v2130 = vld [vmem:[%s5 + $0x18] sm:$0xff]
        %v2131 = vld [vmem:[%s5 + $0x20] sm:$0xff]
        %v2132 = vmul.f32 %v2127, %v2118
        %v2133 = vmul.f32 %v2128, %v2120
        %v2134 = vmul.f32 %v2129, %v2122
        %v2135 = vmul.f32 %v2130, %v2124
        %v2136 = vmul.f32 %v2131, %v2126
        %vm2137 = vcmask 605184
        %v2138 = vsel %vm2137, %v2132, 0.0
        %2139 = vadd.xlane.f32.xlu0 %v2138
        %v2140 = vpop.xlane.xlu0 %2139
        %v2141 = vsel %vm2137, %v2133, 0.0
        %2142 = vadd.xlane.f32.xlu0 %v2141
        %v2143 = vpop.xlane.xlu0 %2142
        %v2144 = vsel %vm2137, %v2134, 0.0
        %2145 = vadd.xlane.f32.xlu0 %v2144
        %v2146 = vpop.xlane.xlu0 %2145
        %v2147 = vsel %vm2137, %v2135, 0.0
        %2148 = vadd.xlane.f32.xlu0 %v2147
        %v2149 = vpop.xlane.xlu0 %2148
        %v2150 = vsel %vm2137, %v2136, 0.0
        %2151 = vadd.xlane.f32.xlu0 %v2150
        %v2152 = vpop.xlane.xlu0 %2151
        %s2153 = scalar_lea.vmem %s5, 40
        %v2154 = vld [vmem:[%s2153] sm:$0xff]
        %v2155 = vld [vmem:[%s2153 + $0x8] sm:$0xff]
        %v2156 = vld [vmem:[%s2153 + $0x10] sm:$0xff]
        %v2157 = vld [vmem:[%s2153 + $0x18] sm:$0xff]
        %v2158 = vld [vmem:[%s2153 + $0x20] sm:$0xff]
        %v2159 = vmul.f32 %v2154, %v2118
        %v2160 = vmul.f32 %v2155, %v2120
        %v2161 = vmul.f32 %v2156, %v2122
        %v2162 = vmul.f32 %v2157, %v2124
        %v2163 = vmul.f32 %v2158, %v2126
        %v2164 = vsel %vm2137, %v2159, 0.0
        %2165 = vadd.xlane.f32.xlu0 %v2164
        %v2166 = vpop.xlane.xlu0 %2165
        %v2167 = vsel %vm2137, %v2160, 0.0
        %2168 = vadd.xlane.f32.xlu0 %v2167
        %v2169 = vpop.xlane.xlu0 %2168
        %v2170 = vsel %vm2137, %v2161, 0.0
        %2171 = vadd.xlane.f32.xlu0 %v2170
        %v2172 = vpop.xlane.xlu0 %2171
        %v2173 = vsel %vm2137, %v2162, 0.0
        %2174 = vadd.xlane.f32.xlu0 %v2173
        %v2175 = vpop.xlane.xlu0 %2174
        %v2176 = vsel %vm2137, %v2163, 0.0
        %2177 = vadd.xlane.f32.xlu0 %v2176
        %v2178 = vpop.xlane.xlu0 %2177
        %s2179 = scalar_lea.vmem %s5, 80
        %v2180 = vld [vmem:[%s2179] sm:$0xff]
        %v2181 = vld [vmem:[%s2179 + $0x8] sm:$0xff]
        %v2182 = vld [vmem:[%s2179 + $0x10] sm:$0xff]
        %v2183 = vld [vmem:[%s2179 + $0x18] sm:$0xff]
        %v2184 = vld [vmem:[%s2179 + $0x20] sm:$0xff]
        %v2185 = vmul.f32 %v2180, %v2118
        %v2186 = vmul.f32 %v2181, %v2120
        %v2187 = vmul.f32 %v2182, %v2122
        %v2188 = vmul.f32 %v2183, %v2124
        %v2189 = vmul.f32 %v2184, %v2126
        %v2190 = vsel %vm2137, %v2185, 0.0
        %2191 = vadd.xlane.f32.xlu0 %v2190
        %v2192 = vpop.xlane.xlu0 %2191
        %v2193 = vsel %vm2137, %v2186, 0.0
        %2194 = vadd.xlane.f32.xlu0 %v2193
        %v2195 = vpop.xlane.xlu0 %2194
        %v2196 = vsel %vm2137, %v2187, 0.0
        %2197 = vadd.xlane.f32.xlu0 %v2196
        %v2198 = vpop.xlane.xlu0 %2197
        %v2199 = vsel %vm2137, %v2188, 0.0
        %2200 = vadd.xlane.f32.xlu0 %v2199
        %v2201 = vpop.xlane.xlu0 %2200
        %v2202 = vsel %vm2137, %v2189, 0.0
        %2203 = vadd.xlane.f32.xlu0 %v2202
        %v2204 = vpop.xlane.xlu0 %2203
        %s2205 = scalar_lea.vmem %s5, 120
        %v2206 = vld [vmem:[%s2205] sm:$0xff]
        %v2207 = vld [vmem:[%s2205 + $0x8] sm:$0xff]
        %v2208 = vld [vmem:[%s2205 + $0x10] sm:$0xff]
        %v2209 = vld [vmem:[%s2205 + $0x18] sm:$0xff]
        %v2210 = vld [vmem:[%s2205 + $0x20] sm:$0xff]
        %v2211 = vmul.f32 %v2206, %v2118
        %v2212 = vmul.f32 %v2207, %v2120
        %v2213 = vmul.f32 %v2208, %v2122
        %v2214 = vmul.f32 %v2209, %v2124
        %v2215 = vmul.f32 %v2210, %v2126
        %v2216 = vsel %vm2137, %v2211, 0.0
        %2217 = vadd.xlane.f32.xlu0 %v2216
        %v2218 = vpop.xlane.xlu0 %2217
        %v2219 = vsel %vm2137, %v2212, 0.0
        %2220 = vadd.xlane.f32.xlu0 %v2219
        %v2221 = vpop.xlane.xlu0 %2220
        %v2222 = vsel %vm2137, %v2213, 0.0
        %2223 = vadd.xlane.f32.xlu0 %v2222
        %v2224 = vpop.xlane.xlu0 %2223
        %v2225 = vsel %vm2137, %v2214, 0.0
        %2226 = vadd.xlane.f32.xlu0 %v2225
        %v2227 = vpop.xlane.xlu0 %2226
        %v2228 = vsel %vm2137, %v2215, 0.0
        %2229 = vadd.xlane.f32.xlu0 %v2228
        %v2230 = vpop.xlane.xlu0 %2229
        %vm2231 = vcmask 7168
        %v2232 = vsel %vm2231, %v2140, %v2166
        %v2233 = vsel %vm2231, %v2143, %v2169
        %v2234 = vsel %vm2231, %v2146, %v2172
        %v2235 = vsel %vm2231, %v2149, %v2175
        %v2236 = vsel %vm2231, %v2152, %v2178
        %vm2237 = vcmask 15360
        %v2238 = vsel %vm2237, %v2232, %v2192
        %v2239 = vsel %vm2237, %v2233, %v2195
        %v2240 = vsel %vm2237, %v2234, %v2198
        %v2241 = vsel %vm2237, %v2235, %v2201
        %v2242 = vsel %vm2237, %v2236, %v2204
        %vm2243 = vcmask 23552
        %v2244 = vsel %vm2243, %v2238, %v2218
        %v2245 = vsel %vm2243, %v2239, %v2221
        %v2246 = vsel %vm2243, %v2240, %v2224
        %v2247 = vsel %vm2243, %v2241, %v2227
        %v2248 = vsel %vm2243, %v2242, %v2230
        %vm2249 = vcmask 31744
        %v2250 = vsel %vm2249, %v2244, 0.0
        %v2251 = vsel %vm2249, %v2245, 0.0
        %v2252 = vadd.f32 %v2250, %v2251
        %v2253 = vsel %vm2249, %v2246, 0.0
        %v2254 = vadd.f32 %v2252, %v2253
        %v2255 = vsel %vm2249, %v2247, 0.0
        %v2256 = vadd.f32 %v2254, %v2255
        %v2257 = vsel %vm2249, %v2248, 0.0
        %v2258 = vadd.f32 %v2256, %v2257
        %v2259 = vrot.slane %v2258, 4
        %v2260 = vadd.f32 %v2258, %v2259
        %v2261 = vrot.slane %v2260, 2
        %v2262 = vadd.f32 %v2260, %v2261
        %v2263 = vrot.slane %v2262, 1
        %v2264 = vadd.f32 %v2262, %v2263
        %v2265 = vld [vmem:[%s6] sm:$0x1]
        %v2266 = vadd.f32 %v2264, %v2265
        %vm2267 = vcmask 24576
        %2268 = vst.msk [vmem:[%s270] sm:$0x1] %vm2267, %v2266
        %s2269 = sand.u32 %s181, 1
        %s2270 = scalar_lea.sflag [#allocation3], %s2269
        %s2271 = sand.u32 %s181, 1
        %s2272 = scalar_lea.vmem [#allocation2], %s2271
        // Predicated region
        $region49: #{shallow_conv_net_forward.1} parent=47 // pred_check
          %p2273 = pneg %p191
        $region50: #{shallow_conv_net_forward.1} parent=47 // pred_check_branch
          %2275 = sbr.rel (%p2273) target = $region52
        $region51: #{shallow_conv_net_forward.1} parent=47 // pred_region
          %s2277 = ssub.s32 16, 16
          %2278 = vsyncadd %s2270, %s2277
          %s2279 = smul.addr %s21, 16
          %s2280 = scalar_lea.hbm %s7, %s2279
          %s2282 = sshll.u32 %s2272, 4
          %s2283 = int_to_ptr.vmem [resolvable:$true] %s2282
          %2285 = dma.vmem_to_hbm [thread:$0]  %s2283, 16, %s2280, %s2270
        $region52: #{shallow_conv_net_forward.1} parent=47 // pred_fallthru
          _
      $region48: #{shallow_conv_net_forward.1} parent=5 // pred_fallthru
        _
      %p2286 = scmp.le.s32.totalorder 2, %s16
      // Predicated region
      $region53: #{shallow_conv_net_forward.1} parent=5 // pred_check
        %p2287 = pneg %p2286
      $region54: #{shallow_conv_net_forward.1} parent=5 // pred_check_branch
        %2289 = sbr.rel (%p2287) target = $region56
      $region55: #{shallow_conv_net_forward.1} parent=5 // pred_region
        %s2290 = ssub.s32 %s16, 2
        // Predicated region
        $region57: #{shallow_conv_net_forward.1} parent=55 // pred_check
          %p2291 = pneg %p197
        $region58: #{shallow_conv_net_forward.1} parent=55 // pred_check_branch
          %2293 = sbr.rel (%p2291) target = $region60
        $region59: #{shallow_conv_net_forward.1} parent=55 // pred_region
          %s2294 = sand.u32 %s182, 1
          %s2295 = scalar_lea.sflag [#allocation3], %s2294
          %s2296 = sand.u32 %s182, 1
          %s2297 = scalar_lea.vmem [#allocation2], %s2296
          %2298 = dma.done %s2295, 16
        $region60: #{shallow_conv_net_forward.1} parent=55 // pred_fallthru
          _
      $region56: #{shallow_conv_net_forward.1} parent=5 // pred_fallthru
        _
    $region6: #{shallow_conv_net_forward.1} parent=1 // loop_footer
      %s20 = sadd.s32 1, %s16
    $region7: #{shallow_conv_net_forward.1} parent=1 // loop_footer_branch
      %15 = sbr.rel target = $region3
    $region8: #{shallow_conv_net_forward.1} parent=1 // loop_exit
      _
    %2299 = vsyncpa [#allocation3], 1
    %s2300 = scalar_lea.sflag [#allocation3], 1
    %2301 = vsyncpa %s2300, 1

</llo_original>
